<compile_context>
chip_gen: v7x
topology: tpu7x:2x2x1
jax: 0.10.0
libtpu: 0.0.40
codegen_flags: <defaults>
</compile_context>

<pallas_src>
import functools
import math

import jax
import jax.numpy as jnp
from jax.experimental import pallas as pl
from jax.experimental.pallas import tpu as pltpu

TS_GEMM = 512   # row tile for the GEMM kernels (multiple of 8)
TS_ELT = 1024   # row tile for the elementwise normalize kernel


def _round_up(v, m):
    return ((v + m - 1) // m) * m


# ----------------------------- Pallas kernels -----------------------------

def _gemm_stats_kernel(a_ref, w_ref, b_ref, y_ref, st_ref, *, s_total, ts):
    """y = A @ W + b (bf16 MXU operands, f32 accumulate) and per-channel
    sum / sum-of-squares accumulated in the epilogue for the fused
    InstanceNorm that follows."""
    a = a_ref[...].astype(jnp.bfloat16)
    w = w_ref[...].astype(jnp.bfloat16)
    y = jnp.dot(a, w, preferred_element_type=jnp.float32) + b_ref[...]
    y_ref[...] = y
    if s_total % ts:  # static check: only traced when a partial tile can exist
        valid = s_total - pl.program_id(1) * ts
        rows = jax.lax.broadcasted_iota(jnp.int32, y.shape, 0)
        y = jnp.where(rows < valid, y, 0.0)
    st_ref[...] = jnp.concatenate(
        [jnp.sum(y, axis=0, keepdims=True),
         jnp.sum(y * y, axis=0, keepdims=True)], axis=0)


def _in_lrelu_kernel(y_ref, st_ref, o_ref, *, inv_n):
    """InstanceNorm3d(affine=False, eps=1e-5) + LeakyReLU(0.2) given the
    per-(batch, channel) sum / sumsq computed by the GEMM epilogue."""
    st = st_ref[...]                                  # (2, C) f32
    mean = st[0:1, :] * inv_n
    var = jnp.maximum(st[1:2, :] * inv_n - mean * mean, 0.0)
    scale = jax.lax.rsqrt(var + 1e-5)
    xn = (y_ref[...] - mean) * scale
    o_ref[...] = jnp.where(xn >= 0, xn, 0.2 * xn)


def _gemm_softmax_kernel(a_ref, w_ref, b_ref, o_ref):
    """1x1x1 conv (A @ W + b) fused with the channel softmax (f32 epilogue)."""
    a = a_ref[...].astype(jnp.bfloat16)
    w = w_ref[...].astype(jnp.bfloat16)
    y = jnp.dot(a, w, preferred_element_type=jnp.float32) + b_ref[...]
    m = jnp.max(y, axis=-1, keepdims=True)
    e = jnp.exp(y - m)
    o_ref[...] = e / jnp.sum(e, axis=-1, keepdims=True)


# ----------------------------- Pallas wrappers -----------------------------

@jax.jit
def conv_norm_gemm(a3, w2, b):
    """a3: [B, S, K] (f32 or bf16), w2: [K, N], b: [N].
    Returns (y=[B,S,N] f32 pre-norm conv output, stats=[B,2,N] f32 sum/sumsq)."""
    B, S, K = a3.shape
    N = w2.shape[1]
    ts = min(TS_GEMM, _round_up(S, 8))
    ns = pl.cdiv(S, ts)
    kern = functools.partial(_gemm_stats_kernel, s_total=S, ts=ts)
    block_bytes = (2 * ts * K * a3.dtype.itemsize     # A, double buffered
                   + 2 * K * N * w2.dtype.itemsize    # W
                   + 2 * ts * N * 4                   # y out
                   + 4 * N * 4 + 2 * N * 4)           # stats + bias
    vmem = int(min(56 * 1024 * 1024, max(32 * 1024 * 1024, 4 * block_bytes)))
    y, part = pl.pallas_call(
        kern,
        out_shape=(jax.ShapeDtypeStruct((B, S, N), jnp.float32),
                   jax.ShapeDtypeStruct((B, ns, 2, N), jnp.float32)),
        grid=(B, ns),
        in_specs=[
            pl.BlockSpec((None, ts, K), lambda b_, s_: (b_, s_, 0)),
            pl.BlockSpec((K, N), lambda b_, s_: (0, 0)),
            pl.BlockSpec((1, N), lambda b_, s_: (0, 0)),
        ],
        out_specs=(
            pl.BlockSpec((None, ts, N), lambda b_, s_: (b_, s_, 0)),
            pl.BlockSpec((None, None, 2, N), lambda b_, s_: (b_, s_, 0, 0)),
        ),
        compiler_params=pltpu.CompilerParams(
            dimension_semantics=("parallel", "parallel"),
            vmem_limit_bytes=vmem),
    )(a3, w2, b.reshape(1, N))
    return y, jnp.sum(part, axis=1)


@jax.jit
def instnorm_lrelu_apply(y, stats):
    """Tiled normalize + LeakyReLU(0.2). y: [B, S, N] f32, stats: [B, 2, N]."""
    B, S, N = y.shape
    ts = min(TS_ELT, _round_up(S, 8))
    kern = functools.partial(_in_lrelu_kernel, inv_n=1.0 / S)
    return pl.pallas_call(
        kern,
        out_shape=jax.ShapeDtypeStruct((B, S, N), jnp.float32),
        grid=(B, pl.cdiv(S, ts)),
        in_specs=[
            pl.BlockSpec((None, ts, N), lambda b_, s_: (b_, s_, 0)),
            pl.BlockSpec((None, 2, N), lambda b_, s_: (b_, 0, 0)),
        ],
        out_specs=pl.BlockSpec((None, ts, N), lambda b_, s_: (b_, s_, 0)),
        compiler_params=pltpu.CompilerParams(
            dimension_semantics=("parallel", "parallel")),
    )(y, stats)


@jax.jit
def gemm_bias_softmax(a2, w2, b):
    """a2: [M, K], w2: [K, N], b: [N] -> softmax(A @ W + b) over last axis."""
    M, K = a2.shape
    N = w2.shape[1]
    tm = min(TS_GEMM, _round_up(M, 8))
    return pl.pallas_call(
        _gemm_softmax_kernel,
        out_shape=jax.ShapeDtypeStruct((M, N), jnp.float32),
        grid=(pl.cdiv(M, tm),),
        in_specs=[
            pl.BlockSpec((tm, K), lambda i: (i, 0)),
            pl.BlockSpec((K, N), lambda i: (0, 0)),
            pl.BlockSpec((1, N), lambda i: (0, 0)),
        ],
        out_specs=pl.BlockSpec((tm, N), lambda i: (i, 0)),
        compiler_params=pltpu.CompilerParams(
            dimension_semantics=("parallel",)),
    )(a2, w2, b.reshape(1, N))


# ------------------------------ conv helpers ------------------------------

def _im2col_3x3(x, stride):
    """Reflect-pad-1 3x3x3 im2col, materialized in bf16 (half the HBM bytes)."""
    B, D, H, W, cin = x.shape
    xp = jnp.pad(x.astype(jnp.bfloat16),
                 ((0, 0), (1, 1), (1, 1), (1, 1), (0, 0)), mode="reflect")
    Do = (D - 1) // stride + 1
    Ho = (H - 1) // stride + 1
    Wo = (W - 1) // stride + 1
    slabs = []
    for kd in range(3):
        for kh in range(3):
            for kw in range(3):
                slabs.append(
                    xp[:, kd:kd + (Do - 1) * stride + 1:stride,
                          kh:kh + (Ho - 1) * stride + 1:stride,
                          kw:kw + (Wo - 1) * stride + 1:stride, :])
    patches = jnp.stack(slabs, axis=4).reshape(B, Do * Ho * Wo, 27 * cin)
    return patches, (Do, Ho, Wo)


def gconv(p, x, stride=1):
    """general_conv3d: Conv3d -> InstanceNorm3d -> LeakyReLU(0.2).
    weight layout (kd, kh, kw, Cin, Cout); k=3 uses reflect padding of 1."""
    w, b = p["w"], p["b"]
    k = w.shape[0]
    cout = w.shape[-1]
    B, D, H, W, cin = x.shape
    if k == 1:
        a3 = x.reshape(B, D * H * W, cin)
        Do, Ho, Wo = D, H, W
    else:
        a3, (Do, Ho, Wo) = _im2col_3x3(x, stride)
    y, stats = conv_norm_gemm(a3, w.reshape(-1, cout), b)
    y = instnorm_lrelu_apply(y, stats)
    return y.reshape(B, Do, Ho, Wo, cout)


def conv1x1_softmax(p, x):
    """1x1x1 Conv3d (bias) + channel softmax, fused in one Pallas kernel."""
    w, b = p["w"], p["b"]
    B, D, H, W, cin = x.shape
    cout = w.shape[-1]
    out = gemm_bias_softmax(x.reshape(B * D * H * W, cin),
                            w.reshape(cin, cout), b)
    return out.reshape(B, D, H, W, cout)


def _resize_axis(x, axis, out_size):
    in_size = x.shape[axis]
    if in_size == out_size:
        return x
    if in_size == 1:
        return jnp.repeat(x, out_size, axis=axis)
    pos = jnp.arange(out_size, dtype=jnp.float32) * ((in_size - 1) / (out_size - 1))
    lo = jnp.clip(jnp.floor(pos).astype(jnp.int32), 0, in_size - 2)
    frac = pos - lo.astype(jnp.float32)
    xl = jnp.take(x, lo, axis=axis)
    xh = jnp.take(x, lo + 1, axis=axis)
    shape = [1] * x.ndim
    shape[axis] = out_size
    frac = frac.reshape(shape)
    return xl * (1.0 - frac) + xh * frac


def upsample_trilinear(x, factor):
    """nn.Upsample(scale_factor=factor, mode='trilinear', align_corners=True)."""
    B, D, H, W, C = x.shape
    x = _resize_axis(x, 1, D * factor)
    x = _resize_axis(x, 2, H * factor)
    x = _resize_axis(x, 3, W * factor)
    return x


# --------------------------- parameter creation ----------------------------

class KeyGen:
    def __init__(self, seed):
        self._key = jax.random.PRNGKey(seed)

    def __call__(self):
        self._key, sub = jax.random.split(self._key)
        return sub


def init_conv(kg, cin, cout, k):
    fan_in = cin * k ** 3
    w = jax.random.normal(kg(), (k, k, k, cin, cout), jnp.float32) * math.sqrt(2.0 / fan_in)
    bound = 1.0 / math.sqrt(fan_in)
    b = jax.random.uniform(kg(), (cout,), jnp.float32, minval=-bound, maxval=bound)
    return {"w": w, "b": b}


def init_encoder(kg, c):
    return {
        "e1_c1": init_conv(kg, 1, c, 3), "e1_c2": init_conv(kg, c, c, 3), "e1_c3": init_conv(kg, c, c, 3),
        "e2_c1": init_conv(kg, c, 2 * c, 3), "e2_c2": init_conv(kg, 2 * c, 2 * c, 3), "e2_c3": init_conv(kg, 2 * c, 2 * c, 3),
        "e3_c1": init_conv(kg, 2 * c, 4 * c, 3), "e3_c2": init_conv(kg, 4 * c, 4 * c, 3), "e3_c3": init_conv(kg, 4 * c, 4 * c, 3),
        "e4_c1": init_conv(kg, 4 * c, 8 * c, 3), "e4_c2": init_conv(kg, 8 * c, 8 * c, 3), "e4_c3": init_conv(kg, 8 * c, 8 * c, 3),
    }


def init_prm_gen(kg, in_ch, num_cls, num_modal, laststage=False):
    emb = [init_conv(kg, in_ch * num_modal, max(in_ch // 4, 1), 1),
           init_conv(kg, max(in_ch // 4, 1), max(in_ch // 4, 1), 3),
           init_conv(kg, max(in_ch // 4, 1), in_ch, 1)]
    prm_in = in_ch if laststage else in_ch * 2
    prm = [init_conv(kg, prm_in, 16, 1),
           init_conv(kg, 16, num_cls, 1)]
    return {"emb": emb, "prm": prm}


def init_rfm(kg, in_ch, num_cls, num_modal):
    mf = [[init_conv(kg, num_modal * in_ch + 1, 128, 1),
           init_conv(kg, 128, num_modal, 1)] for _ in range(num_cls)]
    rf = [init_conv(kg, num_cls * in_ch, in_ch, 1),
          init_conv(kg, in_ch, in_ch, 3),
          init_conv(kg, in_ch, in_ch // 2, 1)]
    sc = [init_conv(kg, num_modal * in_ch, in_ch, 1),
          init_conv(kg, in_ch, in_ch, 3),
          init_conv(kg, in_ch, in_ch // 2, 1)]
    return {"mf": mf, "rf": rf, "sc": sc}


def init_decoder_fuse(kg, c, num_cls, num_modal):
    return {
        "d3_c1": init_conv(kg, 8 * c, 4 * c, 3), "d3_c2": init_conv(kg, 8 * c, 4 * c, 3), "d3_out": init_conv(kg, 4 * c, 4 * c, 1),
        "d2_c1": init_conv(kg, 4 * c, 2 * c, 3), "d2_c2": init_conv(kg, 4 * c, 2 * c, 3), "d2_out": init_conv(kg, 2 * c, 2 * c, 1),
        "d1_c1": init_conv(kg, 2 * c, c, 3), "d1_c2": init_conv(kg, 2 * c, c, 3), "d1_out": init_conv(kg, c, c, 1),
        "seg": init_conv(kg, c, num_cls, 1),
        "rfm4": init_rfm(kg, 8 * c, num_cls, num_modal),
        "rfm3": init_rfm(kg, 4 * c, num_cls, num_modal),
        "rfm2": init_rfm(kg, 2 * c, num_cls, num_modal),
        "rfm1": init_rfm(kg, c, num_cls, num_modal),
        "prm4": init_prm_gen(kg, 8 * c, num_cls, num_modal, laststage=True),
        "prm3": init_prm_gen(kg, 4 * c, num_cls, num_modal),
        "prm2": init_prm_gen(kg, 2 * c, num_cls, num_modal),
        "prm1": init_prm_gen(kg, c, num_cls, num_modal),
    }


def init_model(kg, cfg):
    c = cfg["conv_dims"]
    return {
        "encoders": {m: init_encoder(kg, c) for m in cfg["modal"]},
        "decoder_fuse": init_decoder_fuse(kg, c, cfg["num_cls"], len(cfg["modal"])),
    }


# ------------------------------ model forward ------------------------------

def encoder_fwd(p, x):
    x1 = gconv(p["e1_c1"], x)
    x1 = x1 + gconv(p["e1_c3"], gconv(p["e1_c2"], x1))
    x2 = gconv(p["e2_c1"], x1, stride=2)
    x2 = x2 + gconv(p["e2_c3"], gconv(p["e2_c2"], x2))
    x3 = gconv(p["e3_c1"], x2, stride=2)
    x3 = x3 + gconv(p["e3_c3"], gconv(p["e3_c2"], x3))
    x4 = gconv(p["e4_c1"], x3, stride=2)
    x4 = x4 + gconv(p["e4_c3"], gconv(p["e4_c2"], x4))
    return x1, x2, x3, x4


def masked_modal(x_modal, mask):
    # x_modal: [B, K, D, H, W, C]; mask: [B, K] bool.  y[~mask] = 0.
    y = jnp.where(mask[:, :, None, None, None, None], x_modal, 0.0)
    B, K, D, H, W, C = y.shape
    y_flat = jnp.transpose(y, (0, 2, 3, 4, 1, 5)).reshape(B, D, H, W, K * C)
    return y, y_flat


def prm_gen_laststage_fwd(p, x_modal, mask):
    _, y_flat = masked_modal(x_modal, mask)
    e = gconv(p["emb"][0], y_flat)
    e = gconv(p["emb"][1], e)
    e = gconv(p["emb"][2], e)
    h = gconv(p["prm"][0], e)
    return conv1x1_softmax(p["prm"][1], h)


def prm_gen_fwd(p, x_dec, x_modal, mask):
    _, y_flat = masked_modal(x_modal, mask)
    e = gconv(p["emb"][0], y_flat)
    e = gconv(p["emb"][1], e)
    e = gconv(p["emb"][2], e)
    h = jnp.concatenate([x_dec, e], axis=-1)
    h = gconv(p["prm"][0], h)
    return conv1x1_softmax(p["prm"][1], h)


def rfm_fwd(p, x_modal, prm, mask):
    # region-aware modal fusion; the tiny per-class MLP is plain jnp (batched
    # over classes) instead of a padded-to-256-rows Pallas GEMM.
    y, y_flat = masked_modal(x_modal, mask)
    B, K, D, H, W, C = y.shape
    num_cls = prm.shape[-1]
    inv_s = 1.0 / (D * H * W)

    prm_avg = jnp.mean(prm, axis=(1, 2, 3)) + 1e-7                      # [B, ncls]
    feat_sum = jnp.einsum("bkdhwc,bdhwi->bikc", y, prm)                 # [B, ncls, K, C]
    feat_avg = feat_sum * inv_s / prm_avg[:, :, None, None]
    feat_vec = jnp.concatenate(
        [feat_avg.reshape(B, num_cls, K * C), prm_avg[:, :, None]], axis=-1)

    w0 = jnp.stack([p["mf"][i][0]["w"].reshape(-1, 128) for i in range(num_cls)])
    b0 = jnp.stack([p["mf"][i][0]["b"] for i in range(num_cls)])
    w1 = jnp.stack([p["mf"][i][1]["w"].reshape(128, K) for i in range(num_cls)])
    b1 = jnp.stack([p["mf"][i][1]["b"] for i in range(num_cls)])

    h = jnp.einsum("bif,ifm->bim", feat_vec, w0) + b0[None]
    h = jnp.where(h >= 0, h, 0.01 * h)                                  # default LeakyReLU
    wgt = jax.nn.sigmoid(jnp.einsum("bim,imk->bik", h, w1) + b1[None])  # [B, ncls, K]

    fused = jnp.einsum("bkdhwc,bik->bdhwic", y, wgt) * prm[..., :, None]
    rf_in = fused.reshape(B, D, H, W, num_cls * C)                      # [B,D,H,W,ncls*C]

    rf = gconv(p["rf"][2], gconv(p["rf"][1], gconv(p["rf"][0], rf_in)))
    sc = gconv(p["sc"][2], gconv(p["sc"][1], gconv(p["sc"][0], y_flat)))
    return jnp.concatenate([rf, sc], axis=-1)                           # [B,D,H,W,C]


def decoder_fuse_fwd(p, x1, x2, x3, x4, mask):
    prm4 = prm_gen_laststage_fwd(p["prm4"], x4, mask)
    de_x4 = rfm_fwd(p["rfm4"], x4, prm4, mask)
    de_x4 = gconv(p["d3_c1"], upsample_trilinear(de_x4, 2))

    prm3 = prm_gen_fwd(p["prm3"], de_x4, x3, mask)
    de_x3 = rfm_fwd(p["rfm3"], x3, prm3, mask)
    de_x3 = jnp.concatenate([de_x3, de_x4], axis=-1)
    de_x3 = gconv(p["d3_out"], gconv(p["d3_c2"], de_x3))
    de_x3 = gconv(p["d2_c1"], upsample_trilinear(de_x3, 2))

    prm2 = prm_gen_fwd(p["prm2"], de_x3, x2, mask)
    de_x2 = rfm_fwd(p["rfm2"], x2, prm2, mask)
    de_x2 = jnp.concatenate([de_x2, de_x3], axis=-1)
    de_x2 = gconv(p["d2_out"], gconv(p["d2_c2"], de_x2))
    de_x2 = gconv(p["d1_c1"], upsample_trilinear(de_x2, 2))

    prm1 = prm_gen_fwd(p["prm1"], de_x2, x1, mask)
    de_x1 = rfm_fwd(p["rfm1"], x1, prm1, mask)
    de_x1 = jnp.concatenate([de_x1, de_x2], axis=-1)
    de_x1 = gconv(p["d1_out"], gconv(p["d1_c2"], de_x1))

    pred = conv1x1_softmax(p["seg"], de_x1)
    return pred, (prm1, prm2, prm3, prm4)


def model2_forward(params, cfg, x, mask):
    """x: [B, num_modal, D, H, W]; mask: [B, num_modal] bool.
    Returns fuse_pred in NCDHW: [B, num_cls, D, H, W] (inference path)."""
    mask = mask.astype(bool)
    mod_feats = []
    for idx, m in enumerate(cfg["modal"]):
        xi = x[:, idx][..., None]            # per-modality input, trailing C=1
        mod_feats.append(encoder_fwd(params["encoders"][m], xi))
    x1 = jnp.stack([f[0] for f in mod_feats], axis=1)   # [B, K, D, H, W, C]
    x2 = jnp.stack([f[1] for f in mod_feats], axis=1)
    x3 = jnp.stack([f[2] for f in mod_feats], axis=1)
    x4 = jnp.stack([f[3] for f in mod_feats], axis=1)
    pred, _ = decoder_fuse_fwd(params["decoder_fuse"], x1, x2, x3, x4, mask)
    return jnp.transpose(pred, (0, 4, 1, 2, 3))


# ----------------------------------- main -----------------------------------

if __name__ == "__main__":
    cfg = {"conv_dims": 4, "num_cls": 4, "img_size": 16, "modal": ["flair", "t1ce"]}

    kg = KeyGen(0)
    params = init_model(kg, cfg)

    key = jax.random.PRNGKey(0)
    x = jax.random.normal(key, (1, len(cfg["modal"]), 16, 16, 16), jnp.float32)
    mask = jnp.ones((1, len(cfg["modal"])), dtype=bool)

    pred = model2_forward(params, cfg, x, mask)
    pred = jax.block_until_ready(pred)

    assert pred.shape == (1, cfg["num_cls"], 16, 16, 16)
    assert bool(jnp.all(jnp.isfinite(pred)))
    print("KERNEL_OK")
</pallas_src>

<mosaic_0001>
module attributes {stable_mosaic.version = 11 : i64} {
  func.func @_gemm_stats_kernel(%arg0: i32, %arg1: i32, %arg2: memref<1x512x27xbf16, #tpu.memory_space<vmem>>, %arg3: memref<27x4xf32, #tpu.memory_space<vmem>>, %arg4: memref<1x4xf32, #tpu.memory_space<vmem>>, %arg5: memref<1x512x4xf32, #tpu.memory_space<vmem>>, %arg6: memref<1x1x2x4xf32, #tpu.memory_space<vmem>>) attributes {dimension_semantics = [#tpu.dimension_semantics<parallel>, #tpu.dimension_semantics<parallel>], iteration_bounds = array<i64: 1, 8>, scalar_prefetch = 0 : i64, scratch_operands = 0 : i64, tpu.core_type = #tpu.core_type<tc>, window_params = [{transform_indices = @transform_0, window_bounds = array<i64: 1, 512, 27>}, {pipeline_mode = #tpu.pipeline_mode<synchronous>, transform_indices = @transform_1, window_bounds = array<i64: 27, 4>}, {pipeline_mode = #tpu.pipeline_mode<synchronous>, transform_indices = @transform_2, window_bounds = array<i64: 1, 4>}, {transform_indices = @transform_3, window_bounds = array<i64: 1, 512, 4>}, {transform_indices = @transform_4, window_bounds = array<i64: 1, 1, 2, 4>}]} {
    %c0 = arith.constant 0 : index
    %c0_0 = arith.constant 0 : index
    %c0_1 = arith.constant 0 : index
    %0 = vector.load %arg2[%c0, %c0_0, %c0_1] : memref<1x512x27xbf16, #tpu.memory_space<vmem>>, vector<1x512x27xbf16>
    %1 = vector.shape_cast %0 : vector<1x512x27xbf16> to vector<512x27xbf16>
    %c0_2 = arith.constant 0 : index
    %c0_3 = arith.constant 0 : index
    %2 = vector.load %arg3[%c0_2, %c0_3] : memref<27x4xf32, #tpu.memory_space<vmem>>, vector<27x4xf32>
    %3 = arith.truncf %2 : vector<27x4xf32> to vector<27x4xbf16>
    %cst = arith.constant dense<0.000000e+00> : vector<512x4xf32>
    %4 = tpu.matmul %1, %3, %cst {dimension_numbers = #tpu.dot_dimension_numbers<[1], [0], [0], [1], [0, 0, 1, 1], [], []>} : vector<512x27xbf16>, vector<27x4xbf16>, vector<512x4xf32> -> vector<512x4xf32>
    %c0_4 = arith.constant 0 : index
    %c0_5 = arith.constant 0 : index
    %5 = vector.load %arg4[%c0_4, %c0_5] : memref<1x4xf32, #tpu.memory_space<vmem>>, vector<1x4xf32>
    %6 = vector.broadcast %5 : vector<1x4xf32> to vector<512x4xf32>
    %7 = arith.addf %4, %6 : vector<512x4xf32>
    %c0_6 = arith.constant 0 : index
    %c0_7 = arith.constant 0 : index
    %c0_8 = arith.constant 0 : index
    %8 = vector.load %arg5[%c0_6, %c0_7, %c0_8] : memref<1x512x4xf32, #tpu.memory_space<vmem>>, vector<1x512x4xf32>
    %9 = vector.shape_cast %8 : vector<1x512x4xf32> to vector<512x4xf32>
    %10 = vector.shape_cast %7 : vector<512x4xf32> to vector<1x512x4xf32>
    tpu.vector_store %arg5[%c0_6, %c0_7, %c0_8], %10 {strides = array<i32>} : memref<1x512x4xf32, #tpu.memory_space<vmem>>, vector<1x512x4xf32>,
    %cst_9 = arith.constant dense<0.000000e+00> : vector<4xf32>
    %11 = vector.multi_reduction <add>, %7, %cst_9 [0] : vector<512x4xf32> to vector<4xf32>
    %12 = vector.shape_cast %11 : vector<4xf32> to vector<1x4xf32>
    %13 = arith.mulf %7, %7 : vector<512x4xf32>
    %cst_10 = arith.constant dense<0.000000e+00> : vector<4xf32>
    %14 = vector.multi_reduction <add>, %13, %cst_10 [0] : vector<512x4xf32> to vector<4xf32>
    %15 = vector.shape_cast %14 : vector<4xf32> to vector<1x4xf32>
    %16 = tpu.concatenate %12, %15 in 0 : vector<1x4xf32>, vector<1x4xf32> -> vector<2x4xf32>
    %c0_11 = arith.constant 0 : index
    %c0_12 = arith.constant 0 : index
    %c0_13 = arith.constant 0 : index
    %c0_14 = arith.constant 0 : index
    %17 = vector.load %arg6[%c0_11, %c0_12, %c0_13, %c0_14] : memref<1x1x2x4xf32, #tpu.memory_space<vmem>>, vector<1x1x2x4xf32>
    %18 = vector.shape_cast %17 : vector<1x1x2x4xf32> to vector<2x4xf32>
    %19 = vector.shape_cast %16 : vector<2x4xf32> to vector<1x1x2x4xf32>
    tpu.vector_store %arg6[%c0_11, %c0_12, %c0_13, %c0_14], %19 {strides = array<i32>} : memref<1x1x2x4xf32, #tpu.memory_space<vmem>>, vector<1x1x2x4xf32>,
    return
  }
  func.func @transform_0(%arg0: i32, %arg1: i32) -> (i32, i32, i32) {
    %c0_i32 = arith.constant 0 : i32
    %c0_i32_0 = arith.constant 0 : i32
    return %arg0, %arg1, %c0_i32 : i32, i32, i32
  }
  func.func @transform_1(%arg0: i32, %arg1: i32) -> (i32, i32) {
    %c0_i32 = arith.constant 0 : i32
    %c0_i32_0 = arith.constant 0 : i32
    %c0_i32_1 = arith.constant 0 : i32
    return %c0_i32, %c0_i32_0 : i32, i32
  }
  func.func @transform_2(%arg0: i32, %arg1: i32) -> (i32, i32) {
    %c0_i32 = arith.constant 0 : i32
    %c0_i32_0 = arith.constant 0 : i32
    %c0_i32_1 = arith.constant 0 : i32
    return %c0_i32, %c0_i32_0 : i32, i32
  }
  func.func @transform_3(%arg0: i32, %arg1: i32) -> (i32, i32, i32) {
    %c0_i32 = arith.constant 0 : i32
    %c0_i32_0 = arith.constant 0 : i32
    return %arg0, %arg1, %c0_i32 : i32, i32, i32
  }
  func.func @transform_4(%arg0: i32, %arg1: i32) -> (i32, i32, i32, i32) {
    %c0_i32 = arith.constant 0 : i32
    %c0_i32_0 = arith.constant 0 : i32
    %c0_i32_1 = arith.constant 0 : i32
    return %arg0, %arg1, %c0_i32, %c0_i32_0 : i32, i32, i32, i32
  }
}

</mosaic_0001>

<llo_original>
// kernel: conv_norm_gemm.1
$region0: #{conv_norm_gemm.1}
  #allocation0 [shape = 'u32[]', space=smem, size = 0x4, offset = 0x4, fixed_abs, tag = 'smem constant byte address 0x4 - core index']
  #allocation1 [shape = 'u32[144,128]{1,0:T(1,128)}', space=vmem, size = 0x12000, scoped, tag = 'internal scratch']
  %s0 = inlined_call_operand.vmem [shape: bf16[1,4096,27], index: 0, kind: input, shape index: {}]
  %s1 = inlined_call_operand.vmem [shape: f32[27,4], index: 1, kind: input, shape index: {}]
  %s2 = inlined_call_operand.hbm [shape: f32[1,4], index: 2, kind: input, shape index: {}]
  %s3 = inlined_call_operand.vmem [shape: f32[1,4096,4], index: 3, kind: output, shape index: {0}]
  %s4 = inlined_call_operand.vmem [shape: f32[1,8,2,4], index: 4, kind: output, shape index: {1}]
  %5 = xla_tuple %s3, %s4
  %s6 = sld [smem:[#allocation0]]
  $region57: #{conv_norm_gemm.1} parent=0
    _
  %s8 = ssub.s32 1, %s6
  %s9 = scalar_select 0, %s8, %s6
  $region1: #{conv_norm_gemm.1} parent=0
    #allocation2 [shape = 'u8[512]{0}', space=vmem, size = 0x400, scoped, tag = 'input window, operand 2, single buffered']
    #allocation3 [shape = 's32[2]{0}', space=sflag, size = 0x8, scoped, tag = 'scoped memory for conv_norm_gemm.1']
    %10 = vsyncpa [#allocation3], 0
    loop: start=0, step=1, limit=10
    $region2: #{conv_norm_gemm.1} parent=1 // loop_pre_header
      _
    $region3: #{conv_norm_gemm.1} parent=1 // loop_header
      %s12 = sphi 0, %s16
      %p13 = scmp.ge.s32.totalorder %s12, 10
      %s19 = sphi 0, %s31
      %s20 = sphi 0, %s27
      %s21 = sphi 0, %s19
      %s22 = sphi 0, %s20
      %s23 = sphi 0, %s21
      %s24 = sphi 0, %s22
      %s36 = sphi 0, %s38
      %s39 = sphi 0, %s36
      %s40 = sphi 0, %s39
      %s56 = sphi 0, %s40
      %s60 = sphi 0, %s60
      %s62 = sphi 0, %s60
      %s63 = sphi 0, %s62
      %s77 = sphi 0, %s63
      %s81 = sphi 0, %s81
      %s83 = sphi 0, %s81
      %s84 = sphi 0, %s83
      %s98 = sphi 0, %s84
      %s106 = sphi 0, %s108
      %s109 = sphi 0, %s106
      %s110 = sphi 0, %s109
      %s126 = sphi 0, %s110
      %s134 = sphi 0, %s136
      %s137 = sphi 0, %s134
      %s138 = sphi 0, %s137
      %s154 = sphi 0, %s138
    $region4: #{conv_norm_gemm.1} parent=1 // loop_header_branch
      %15 = sbr.rel (%p13) target = $region8
    $region5: #{conv_norm_gemm.1} parent=1 // loop_body
      %s17 = ssub.s32 %s12, 1
      %s18 = ssub.s32 %s12, 2
      %s25 = sadd.s32 1, %s20
      %p26 = scmp.ge.s32.totalorder %s25, 8
      %s27 = scalar_select %p26, 0, %s25
      %s28 = sadd.s32 1, %s19
      %s29 = scalar_select %p26, %s28, %s19
      %p30 = scmp.ge.s32.totalorder %s29, 1
      %s31 = scalar_select %p30, 0, %s29
      %s32 = ssub.s32 %s19, %s31
      %s33 = ssub.s32 %s20, %s27
      %s34 = sor.u32 %s32, %s33
      %p35 = scmp.eq.s32.totalorder %s34, 0
      %s37 = sadd.s32 %s36, 1
      %s38 = scalar_select %p35, %s36, %s37
      %p41 = pneg %p35
      %p42 = scmp.eq.s32.totalorder %s12, 7
      %p43 = por %p41, %p42
      %p44 = scmp.ne.s32.totalorder %s36, %s39
      %p45 = scmp.eq.s32.totalorder %s12, 0
      %p46 = por %p44, %p45
      %p47 = scmp.ne.s32.totalorder %s36, %s39
      %p48 = scmp.eq.s32.totalorder %s17, 7
      %p49 = por %p47, %p48
      %p50 = scmp.ne.s32.totalorder %s39, %s40
      %p51 = scmp.eq.s32.totalorder %s17, 0
      %p52 = por %p50, %p51
      %p53 = scmp.ne.s32.totalorder %s39, %s40
      %p54 = scmp.eq.s32.totalorder %s18, 7
      %p55 = por %p53, %p54
      %p57 = scmp.ne.s32.totalorder %s40, %s56
      %p58 = scmp.eq.s32.totalorder %s18, 0
      %p59 = por %p57, %p58
      %s61 = sadd.s32 %s60, 1
      %p64 = scmp.eq.s32.totalorder %s12, 7
      %p65 = scmp.ne.s32.totalorder %s60, %s62
      %p66 = scmp.eq.s32.totalorder %s12, 0
      %p67 = por %p65, %p66
      %p68 = scmp.ne.s32.totalorder %s60, %s62
      %p69 = scmp.eq.s32.totalorder %s17, 7
      %p70 = por %p68, %p69
      %p71 = scmp.ne.s32.totalorder %s62, %s63
      %p72 = scmp.eq.s32.totalorder %s17, 0
      %p73 = por %p71, %p72
      %p74 = scmp.ne.s32.totalorder %s62, %s63
      %p75 = scmp.eq.s32.totalorder %s18, 7
      %p76 = por %p74, %p75
      %p78 = scmp.ne.s32.totalorder %s63, %s77
      %p79 = scmp.eq.s32.totalorder %s18, 0
      %p80 = por %p78, %p79
      %s82 = sadd.s32 %s81, 1
      %p85 = scmp.eq.s32.totalorder %s12, 7
      %p86 = scmp.ne.s32.totalorder %s81, %s83
      %p87 = scmp.eq.s32.totalorder %s12, 0
      %p88 = por %p86, %p87
      %p89 = scmp.ne.s32.totalorder %s81, %s83
      %p90 = scmp.eq.s32.totalorder %s17, 7
      %p91 = por %p89, %p90
      %p92 = scmp.ne.s32.totalorder %s83, %s84
      %p93 = scmp.eq.s32.totalorder %s17, 0
      %p94 = por %p92, %p93
      %p95 = scmp.ne.s32.totalorder %s83, %s84
      %p96 = scmp.eq.s32.totalorder %s18, 7
      %p97 = por %p95, %p96
      %p99 = scmp.ne.s32.totalorder %s84, %s98
      %p100 = scmp.eq.s32.totalorder %s18, 0
      %p101 = por %p99, %p100
      %s102 = ssub.s32 %s19, %s31
      %s103 = ssub.s32 %s20, %s27
      %s104 = sor.u32 %s102, %s103
      %p105 = scmp.eq.s32.totalorder %s104, 0
      %s107 = sadd.s32 %s106, 1
      %s108 = scalar_select %p105, %s106, %s107
      %p111 = pneg %p105
      %p112 = scmp.eq.s32.totalorder %s12, 7
      %p113 = por %p111, %p112
      %p114 = scmp.ne.s32.totalorder %s106, %s109
      %p115 = scmp.eq.s32.totalorder %s12, 0
      %p116 = por %p114, %p115
      %p117 = scmp.ne.s32.totalorder %s106, %s109
      %p118 = scmp.eq.s32.totalorder %s17, 7
      %p119 = por %p117, %p118
      %p120 = scmp.ne.s32.totalorder %s109, %s110
      %p121 = scmp.eq.s32.totalorder %s17, 0
      %p122 = por %p120, %p121
      %p123 = scmp.ne.s32.totalorder %s109, %s110
      %p124 = scmp.eq.s32.totalorder %s18, 7
      %p125 = por %p123, %p124
      %p127 = scmp.ne.s32.totalorder %s110, %s126
      %p128 = scmp.eq.s32.totalorder %s18, 0
      %p129 = por %p127, %p128
      %s130 = ssub.s32 %s19, %s31
      %s131 = ssub.s32 %s20, %s27
      %s132 = sor.u32 %s130, %s131
      %p133 = scmp.eq.s32.totalorder %s132, 0
      %s135 = sadd.s32 %s134, 1
      %s136 = scalar_select %p133, %s134, %s135
      %p139 = pneg %p133
      %p140 = scmp.eq.s32.totalorder %s12, 7
      %p141 = por %p139, %p140
      %p142 = scmp.ne.s32.totalorder %s134, %s137
      %p143 = scmp.eq.s32.totalorder %s12, 0
      %p144 = por %p142, %p143
      %p145 = scmp.ne.s32.totalorder %s134, %s137
      %p146 = scmp.eq.s32.totalorder %s17, 7
      %p147 = por %p145, %p146
      %p148 = scmp.ne.s32.totalorder %s137, %s138
      %p149 = scmp.eq.s32.totalorder %s17, 0
      %p150 = por %p148, %p149
      %p151 = scmp.ne.s32.totalorder %s137, %s138
      %p152 = scmp.eq.s32.totalorder %s18, 7
      %p153 = por %p151, %p152
      %p155 = scmp.ne.s32.totalorder %s138, %s154
      %p156 = scmp.eq.s32.totalorder %s18, 0
      %p157 = por %p155, %p156
      %p158 = scmp.le.s32.totalorder 1, %s12
      %p159 = scmp.lt.s32.totalorder %s12, 9
      %p160 = pnand %p158, %p159
      %p161 = pneg %p160
      // Predicated region
      $region9: #{conv_norm_gemm.1} parent=5 // pred_check
        _
      $region10: #{conv_norm_gemm.1} parent=5 // pred_check_branch
        %163 = sbr.rel (%p160) target = $region12
      $region11: #{conv_norm_gemm.1} parent=5 // pred_region
        %s164 = ssub.s32 %s12, 1
        // Predicated region
        $region13: #{conv_norm_gemm.1} parent=11 // pred_check
          %p165 = pneg %p73
        $region14: #{conv_norm_gemm.1} parent=11 // pred_check_branch
          %167 = sbr.rel (%p165) target = $region16
        $region15: #{conv_norm_gemm.1} parent=11 // pred_region
          _
        $region16: #{conv_norm_gemm.1} parent=11 // pred_fallthru
          _
        // Predicated region
        $region17: #{conv_norm_gemm.1} parent=11 // pred_check
          %p168 = pneg %p94
        $region18: #{conv_norm_gemm.1} parent=11 // pred_check_branch
          %170 = sbr.rel (%p168) target = $region20
        $region19: #{conv_norm_gemm.1} parent=11 // pred_region
          %s172 = ssub.s32 16, 16
          %173 = vsyncadd [#allocation3], %s172
          %s175 = sshll.u32 [#allocation2], 4
          %s176 = int_to_ptr.vmem [resolvable:$true] %s175
          %178 = dma.hbm_to_vmem [thread:$0]  %s2, 16, %s176, [#allocation3]
        $region20: #{conv_norm_gemm.1} parent=11 // pred_fallthru
          _
      $region12: #{conv_norm_gemm.1} parent=5 // pred_fallthru
        _
      %p179 = scmp.lt.s32.totalorder %s12, 8
      // Predicated region
      $region21: #{conv_norm_gemm.1} parent=5 // pred_check
        %p180 = pneg %p179
      $region22: #{conv_norm_gemm.1} parent=5 // pred_check_branch
        %182 = sbr.rel (%p180) target = $region24
      $region23: #{conv_norm_gemm.1} parent=5 // pred_region
        // Predicated region
        $region25: #{conv_norm_gemm.1} parent=23 // pred_check
          %p183 = pneg %p46
        $region26: #{conv_norm_gemm.1} parent=23 // pred_check_branch
          %185 = sbr.rel (%p183) target = $region28
        $region27: #{conv_norm_gemm.1} parent=23 // pred_region
          %s186 = smul.u32 64, %s20
          %p187 = scmp.lt.s32.totalorder %s19, 0
          %s188 = scalar_select %p187, %s19, 0
          %p189 = scmp.lt.s32.totalorder %s186, 511
          %s190 = scalar_select %p189, %s186, 511
          %s191 = smul.addr %s188, 512
          %s192 = sadd.s32 %s190, %s191
          %s193 = smul.addr %s192, 4
          %s194 = scalar_lea.vmem %s0, %s193
          %s195 = smul.u32 64, %s20
        $region28: #{conv_norm_gemm.1} parent=23 // pred_fallthru
          _
      $region24: #{conv_norm_gemm.1} parent=5 // pred_fallthru
        _
      %p196 = scmp.le.s32.totalorder 1, %s12
      %p197 = scmp.lt.s32.totalorder %s12, 9
      %p198 = pnand %p196, %p197
      %p199 = pneg %p198
      // Predicated region
      $region29: #{conv_norm_gemm.1} parent=5 // pred_check
        _
      $region30: #{conv_norm_gemm.1} parent=5 // pred_check_branch
        %201 = sbr.rel (%p198) target = $region32
      $region31: #{conv_norm_gemm.1} parent=5 // pred_region
        %s202 = ssub.s32 %s12, 1
        // Predicated region
        $region33: #{conv_norm_gemm.1} parent=31 // pred_check
          %p203 = pneg %p94
        $region34: #{conv_norm_gemm.1} parent=31 // pred_check_branch
          %205 = sbr.rel (%p203) target = $region36
        $region35: #{conv_norm_gemm.1} parent=31 // pred_region
          %206 = dma.done [#allocation3], 16
        $region36: #{conv_norm_gemm.1} parent=31 // pred_fallthru
          _
        %s207 = smul.u32 64, %s22
        %p208 = scmp.lt.s32.totalorder %s21, 0
        %s209 = scalar_select %p208, %s21, 0
        %p210 = scmp.lt.s32.totalorder %s207, 511
        %s211 = scalar_select %p210, %s207, 511
        %s212 = smul.addr %s209, 512
        %s213 = sadd.s32 %s211, %s212
        %s214 = smul.addr %s213, 4
        %s215 = scalar_lea.vmem %s0, %s214
        %p216 = pneg %p52
        %p217 = pneg %p49
        %p218 = pneg %p73
        %p219 = pneg %p70
        %p220 = pneg %p94
        %p221 = pneg %p91
        %p222 = pneg %p122
        %p223 = pneg %p119
        %s224 = smul.u32 64, %s22
        %p225 = scmp.lt.s32.totalorder %s21, 0
        %s226 = scalar_select %p225, %s21, 0
        %p227 = scmp.lt.s32.totalorder %s224, 511
        %s228 = scalar_select %p227, %s224, 511
        %s229 = smul.addr %s226, 512
        %s230 = sadd.s32 %s228, %s229
        %s231 = smul.addr %s230, 8
        %s232 = scalar_lea.vmem %s3, %s231
        %p233 = pneg %p150
        %p234 = pneg %p147
        %p235 = scmp.lt.s32.totalorder %s21, 0
        %s236 = scalar_select %p235, %s21, 0
        %p237 = scmp.lt.s32.totalorder %s22, 7
        %s238 = scalar_select %p237, %s22, 7
        %s239 = smul.addr %s236, 8
        %s240 = sadd.s32 %s238, %s239
        %s241 = smul.addr %s240, 2
        %s242 = scalar_lea.vmem %s4, %s241
        %s243 = smul.u32 64, %s22
        %p244 = scmp.lt.s32.totalorder %s21, 0
        %s245 = scalar_select %p244, %s21, 0
        %p246 = scmp.lt.s32.totalorder %s243, 511
        %s247 = scalar_select %p246, %s243, 511
        %s248 = smul.addr %s245, 512
        %s249 = sadd.s32 %s247, %s248
        %s250 = smul.addr %s249, 4
        %s251 = scalar_lea.vmem %s0, %s250
        %s252 = smul.u32 64, %s22
        %s253 = smul.u32 64, %s22
        %p254 = scmp.lt.s32.totalorder %s21, 0
        %s255 = scalar_select %p254, %s21, 0
        %p256 = scmp.lt.s32.totalorder %s253, 511
        %s257 = scalar_select %p256, %s253, 511
        %s258 = smul.addr %s255, 512
        %s259 = sadd.s32 %s257, %s258
        %s260 = smul.addr %s259, 8
        %s261 = scalar_lea.vmem %s3, %s260
        %s262 = smul.u32 64, %s22
        %p263 = scmp.lt.s32.totalorder %s21, 0
        %s264 = scalar_select %p263, %s21, 0
        %p265 = scmp.lt.s32.totalorder %s22, 7
        %s266 = scalar_select %p265, %s22, 7
        %s267 = smul.addr %s264, 8
        %s268 = sadd.s32 %s266, %s267
        %s269 = smul.addr %s268, 2
        %s270 = scalar_lea.vmem %s4, %s269
        %v272 = vld [vmem:[%s251] sm:$0xf]
        %v273 = vld [vmem:[%s251 + $0x4] sm:$0xf]
        %v274 = vld [vmem:[%s251 + $0x8] sm:$0xf]
        %v275 = vld [vmem:[%s251 + $0xc] sm:$0xf]
        %v276 = vld [vmem:[%s251 + $0x10] sm:$0xf]
        %v277 = vld [vmem:[%s251 + $0x14] sm:$0xf]
        %v278 = vld [vmem:[%s251 + $0x18] sm:$0xf]
        %v279 = vld [vmem:[%s251 + $0x1c] sm:$0xf]
        %v280 = vld [vmem:[%s251 + $0x20] sm:$0xf]
        %v281 = vld [vmem:[%s251 + $0x24] sm:$0xf]
        %v282 = vld [vmem:[%s251 + $0x28] sm:$0xf]
        %v283 = vld [vmem:[%s251 + $0x2c] sm:$0xf]
        %v284 = vld [vmem:[%s251 + $0x30] sm:$0xf]
        %v285 = vld [vmem:[%s251 + $0x34] sm:$0xf]
        %v286 = vld [vmem:[%s251 + $0x38] sm:$0xf]
        %v287 = vld [vmem:[%s251 + $0x3c] sm:$0xf]
        %v288 = vld [vmem:[%s251 + $0x40] sm:$0xf]
        %v289 = vld [vmem:[%s251 + $0x44] sm:$0xf]
        %v290 = vld [vmem:[%s251 + $0x48] sm:$0xf]
        %v291 = vld [vmem:[%s251 + $0x4c] sm:$0xf]
        %v292 = vld [vmem:[%s251 + $0x50] sm:$0xf]
        %v293 = vld [vmem:[%s251 + $0x54] sm:$0xf]
        %v294 = vld [vmem:[%s251 + $0x58] sm:$0xf]
        %v295 = vld [vmem:[%s251 + $0x5c] sm:$0xf]
        %v296 = vld [vmem:[%s251 + $0x60] sm:$0xf]
        %v297 = vld [vmem:[%s251 + $0x64] sm:$0xf]
        %v298 = vld [vmem:[%s251 + $0x68] sm:$0xf]
        %v299 = vld [vmem:[%s251 + $0x6c] sm:$0xf]
        %v300 = vld [vmem:[%s251 + $0x70] sm:$0xf]
        %v301 = vld [vmem:[%s251 + $0x74] sm:$0xf]
        %v302 = vld [vmem:[%s251 + $0x78] sm:$0xf]
        %v303 = vld [vmem:[%s251 + $0x7c] sm:$0xf]
        %v304 = vld [vmem:[%s251 + $0x80] sm:$0xf]
        %v305 = vld [vmem:[%s251 + $0x84] sm:$0xf]
        %v306 = vld [vmem:[%s251 + $0x88] sm:$0xf]
        %v307 = vld [vmem:[%s251 + $0x8c] sm:$0xf]
        %v308 = vld [vmem:[%s251 + $0x90] sm:$0xf]
        %v309 = vld [vmem:[%s251 + $0x94] sm:$0xf]
        %v310 = vld [vmem:[%s251 + $0x98] sm:$0xf]
        %v311 = vld [vmem:[%s251 + $0x9c] sm:$0xf]
        %v312 = vld [vmem:[%s251 + $0xa0] sm:$0xf]
        %v313 = vld [vmem:[%s251 + $0xa4] sm:$0xf]
        %v314 = vld [vmem:[%s251 + $0xa8] sm:$0xf]
        %v315 = vld [vmem:[%s251 + $0xac] sm:$0xf]
        %v316 = vld [vmem:[%s251 + $0xb0] sm:$0xf]
        %v317 = vld [vmem:[%s251 + $0xb4] sm:$0xf]
        %v318 = vld [vmem:[%s251 + $0xb8] sm:$0xf]
        %v319 = vld [vmem:[%s251 + $0xbc] sm:$0xf]
        %v320 = vld [vmem:[%s251 + $0xc0] sm:$0xf]
        %v321 = vld [vmem:[%s251 + $0xc4] sm:$0xf]
        %v322 = vld [vmem:[%s251 + $0xc8] sm:$0xf]
        %v323 = vld [vmem:[%s251 + $0xcc] sm:$0xf]
        %v324 = vld [vmem:[%s251 + $0xd0] sm:$0xf]
        %v325 = vld [vmem:[%s251 + $0xd4] sm:$0xf]
        %v326 = vld [vmem:[%s251 + $0xd8] sm:$0xf]
        %v327 = vld [vmem:[%s251 + $0xdc] sm:$0xf]
        %v328 = vld [vmem:[%s251 + $0xe0] sm:$0xf]
        %v329 = vld [vmem:[%s251 + $0xe4] sm:$0xf]
        %v330 = vld [vmem:[%s251 + $0xe8] sm:$0xf]
        %v331 = vld [vmem:[%s251 + $0xec] sm:$0xf]
        %v332 = vld [vmem:[%s251 + $0xf0] sm:$0xf]
        %v333 = vld [vmem:[%s251 + $0xf4] sm:$0xf]
        %v334 = vld [vmem:[%s251 + $0xf8] sm:$0xf]
        %v335 = vld [vmem:[%s251 + $0xfc] sm:$0xf]
        %v336 = vld [vmem:[%s1] sm:$0xff]
        %v337 = vld [vmem:[%s1 + $0x8] sm:$0xff]
        %v338 = vld [vmem:[%s1 + $0x10] sm:$0xff]
        %v339 = vld [vmem:[%s1 + $0x18] sm:$0x7]
        %v340 = vpack.c.bf16 %v337, %v336
        %v341 = vpack.c.bf16 %v339, %v338
        %v342 = vld [vmem:[#allocation2] sm:$0x1]
        %v344 = vlaneseq
        %v345 = vshrl.u32 %v344, 7
        %v346 = vsub.s32 0, %v345
        %v347 = vrot.slane %v342, %v346
        %v413 = vunpack.c.l.b16 %v272
        %v414 = vunpack.c.l.b16 %v273
        %v415 = vunpack.c.l.b16 %v274
        %v416 = vunpack.c.l.b16 %v275
        %v417 = vunpack.c.l.b16 %v276
        %v418 = vunpack.c.l.b16 %v277
        %v419 = vunpack.c.l.b16 %v278
        %v420 = vunpack.c.l.b16 %v279
        %v421 = vunpack.c.l.b16 %v280
        %v422 = vunpack.c.l.b16 %v281
        %v423 = vunpack.c.l.b16 %v282
        %v424 = vunpack.c.l.b16 %v283
        %v425 = vunpack.c.l.b16 %v284
        %v426 = vunpack.c.l.b16 %v285
        %v427 = vunpack.c.l.b16 %v286
        %v428 = vunpack.c.l.b16 %v287
        %v429 = vunpack.c.l.b16 %v288
        %v430 = vunpack.c.l.b16 %v289
        %v431 = vunpack.c.l.b16 %v290
        %v432 = vunpack.c.l.b16 %v291
        %v433 = vunpack.c.l.b16 %v292
        %v434 = vunpack.c.l.b16 %v293
        %v435 = vunpack.c.l.b16 %v294
        %v436 = vunpack.c.l.b16 %v295
        %v437 = vunpack.c.l.b16 %v296
        %v438 = vunpack.c.l.b16 %v297
        %v439 = vunpack.c.l.b16 %v298
        %v440 = vunpack.c.l.b16 %v299
        %v441 = vunpack.c.l.b16 %v300
        %v442 = vunpack.c.l.b16 %v301
        %v443 = vunpack.c.l.b16 %v302
        %v444 = vunpack.c.l.b16 %v303
        %v445 = vunpack.c.l.b16 %v304
        %v446 = vunpack.c.l.b16 %v305
        %v447 = vunpack.c.l.b16 %v306
        %v448 = vunpack.c.l.b16 %v307
        %v449 = vunpack.c.l.b16 %v308
        %v450 = vunpack.c.l.b16 %v309
        %v451 = vunpack.c.l.b16 %v310
        %v452 = vunpack.c.l.b16 %v311
        %v453 = vunpack.c.l.b16 %v312
        %v454 = vunpack.c.l.b16 %v313
        %v455 = vunpack.c.l.b16 %v314
        %v456 = vunpack.c.l.b16 %v315
        %v457 = vunpack.c.l.b16 %v316
        %v458 = vunpack.c.l.b16 %v317
        %v459 = vunpack.c.l.b16 %v318
        %v460 = vunpack.c.l.b16 %v319
        %v461 = vunpack.c.l.b16 %v320
        %v462 = vunpack.c.l.b16 %v321
        %v463 = vunpack.c.l.b16 %v322
        %v464 = vunpack.c.l.b16 %v323
        %v465 = vunpack.c.l.b16 %v324
        %v466 = vunpack.c.l.b16 %v325
        %v467 = vunpack.c.l.b16 %v326
        %v468 = vunpack.c.l.b16 %v327
        %v469 = vunpack.c.l.b16 %v328
        %v470 = vunpack.c.l.b16 %v329
        %v471 = vunpack.c.l.b16 %v330
        %v472 = vunpack.c.l.b16 %v331
        %v473 = vunpack.c.l.b16 %v332
        %v474 = vunpack.c.l.b16 %v333
        %v475 = vunpack.c.l.b16 %v334
        %v476 = vunpack.c.l.b16 %v335
        %v477 = vpack.c.b16 %v414, %v413
        %v478 = vpack.c.b16 %v416, %v415
        %v479 = vpack.c.b16 %v418, %v417
        %v480 = vpack.c.b16 %v420, %v419
        %v481 = vpack.c.b16 %v422, %v421
        %v482 = vpack.c.b16 %v424, %v423
        %v483 = vpack.c.b16 %v426, %v425
        %v484 = vpack.c.b16 %v428, %v427
        %v485 = vpack.c.b16 %v430, %v429
        %v486 = vpack.c.b16 %v432, %v431
        %v487 = vpack.c.b16 %v434, %v433
        %v488 = vpack.c.b16 %v436, %v435
        %v489 = vpack.c.b16 %v438, %v437
        %v490 = vpack.c.b16 %v440, %v439
        %v491 = vpack.c.b16 %v442, %v441
        %v492 = vpack.c.b16 %v444, %v443
        %v493 = vpack.c.b16 %v446, %v445
        %v494 = vpack.c.b16 %v448, %v447
        %v495 = vpack.c.b16 %v450, %v449
        %v496 = vpack.c.b16 %v452, %v451
        %v497 = vpack.c.b16 %v454, %v453
        %v498 = vpack.c.b16 %v456, %v455
        %v499 = vpack.c.b16 %v458, %v457
        %v500 = vpack.c.b16 %v460, %v459
        %v501 = vpack.c.b16 %v462, %v461
        %v502 = vpack.c.b16 %v464, %v463
        %v503 = vpack.c.b16 %v466, %v465
        %v504 = vpack.c.b16 %v468, %v467
        %v505 = vpack.c.b16 %v470, %v469
        %v506 = vpack.c.b16 %v472, %v471
        %v507 = vpack.c.b16 %v474, %v473
        %v508 = vpack.c.b16 %v476, %v475
        %vm509 = vcmask 220160
        %v511 = vsel %vm509, %v477, 0
        %v514 = vsel %vm509, %v478, 0
        %v517 = vsel %vm509, %v479, 0
        %v520 = vsel %vm509, %v480, 0
        %v523 = vsel %vm509, %v481, 0
        %v526 = vsel %vm509, %v482, 0
        %v529 = vsel %vm509, %v483, 0
        %v532 = vsel %vm509, %v484, 0
        %v535 = vsel %vm509, %v485, 0
        %v538 = vsel %vm509, %v486, 0
        %v541 = vsel %vm509, %v487, 0
        %v544 = vsel %vm509, %v488, 0
        %v547 = vsel %vm509, %v489, 0
        %v550 = vsel %vm509, %v490, 0
        %v553 = vsel %vm509, %v491, 0
        %v556 = vsel %vm509, %v492, 0
        %v559 = vsel %vm509, %v493, 0
        %v562 = vsel %vm509, %v494, 0
        %v565 = vsel %vm509, %v495, 0
        %v568 = vsel %vm509, %v496, 0
        %v571 = vsel %vm509, %v497, 0
        %v574 = vsel %vm509, %v498, 0
        %v577 = vsel %vm509, %v499, 0
        %v580 = vsel %vm509, %v500, 0
        %v583 = vsel %vm509, %v501, 0
        %v586 = vsel %vm509, %v502, 0
        %v589 = vsel %vm509, %v503, 0
        %v592 = vsel %vm509, %v504, 0
        %v595 = vsel %vm509, %v505, 0
        %v598 = vsel %vm509, %v506, 0
        %v601 = vsel %vm509, %v507, 0
        %v604 = vsel %vm509, %v508, 0
        %vm606 = vcmask 1044480
        %vm607 = vcmask 1045504
        %v608 = vsel %vm606, 4294967295, 65535
        %v609 = vsel %vm607, %v608, 0
        %v611 = vand.u32 %v341, %v609
        %613 = vmatprep.subr.bf16.mxu0 0
        %614 = vmatpush1.bf16.msra.mxu0 %v340
        %615 = vmatprep.subr.bf16.mxu0 0
        %616 = vmatpush1.bf16.msra.mxu0 %v611
        %617 = vmatprep.subr.bf16.mxu0 0
        %618 = vmatpush1.bf16.msra.mxu0 0
        %619 = vmatprep.subr.bf16.mxu0 0
        %620 = vmatpush1.bf16.msra.mxu0 0
        %621 = vmatprep.subr.bf16.mxu0 0
        %622 = vmatpush1.bf16.msra.mxu0 0
        %623 = vmatprep.subr.bf16.mxu0 0
        %624 = vmatpush1.bf16.msra.mxu0 0
        %625 = vmatprep.subr.bf16.mxu0 0
        %626 = vmatpush1.bf16.msra.mxu0 0
        %627 = vmatprep.subr.bf16.mxu0 0
        %628 = vmatpush1.bf16.msra.mxu0 0
        %629 = vmatprep.subr.bf16.mxu0 0
        %630 = vmatpush1.bf16.msra.mxu0 0
        %631 = vmatprep.subr.bf16.mxu0 0
        %632 = vmatpush1.bf16.msra.mxu0 0
        %633 = vmatprep.subr.bf16.mxu0 0
        %634 = vmatpush1.bf16.msra.mxu0 0
        %635 = vmatprep.subr.bf16.mxu0 0
        %636 = vmatpush1.bf16.msra.mxu0 0
        %637 = vmatprep.subr.bf16.mxu0 0
        %638 = vmatpush1.bf16.msra.mxu0 0
        %639 = vmatprep.subr.bf16.mxu0 0
        %640 = vmatpush1.bf16.msra.mxu0 0
        %641 = vmatprep.subr.bf16.mxu0 0
        %642 = vmatpush1.bf16.msra.mxu0 0
        %643 = vmatprep.subr.bf16.mxu0 0
        %644 = vmatpush1.bf16.msra.mxu0 0
        %645 = vmatprep.mubr.bf16.mxu0 0
        %646 = vmatmul.mubr.bf16.gmra.mrb[0].mxu0 %v511
        %v647 = vpop.f32.mrb[0].mxu0
        %v648 = vadd.f32 %v347, %v647
        %v649 = vpop.f32.mrb[0].mxu0
        %v650 = vpop.f32.mrb[0].mxu0
        %v651 = vadd.f32 %v347, %v650
        %v652 = vpop.f32.mrb[0].mxu0
        %653 = vmatprep.mubr.bf16.mxu0 0
        %654 = vmatmul.mubr.bf16.gmra.mrb[0].mxu0 %v514
        %v655 = vpop.f32.mrb[0].mxu0
        %v656 = vadd.f32 %v347, %v655
        %v657 = vpop.f32.mrb[0].mxu0
        %v658 = vpop.f32.mrb[0].mxu0
        %v659 = vadd.f32 %v347, %v658
        %v660 = vpop.f32.mrb[0].mxu0
        %661 = vmatprep.mubr.bf16.mxu0 0
        %662 = vmatmul.mubr.bf16.gmra.mrb[0].mxu0 %v517
        %v663 = vpop.f32.mrb[0].mxu0
        %v664 = vadd.f32 %v347, %v663
        %v665 = vpop.f32.mrb[0].mxu0
        %v666 = vpop.f32.mrb[0].mxu0
        %v667 = vadd.f32 %v347, %v666
        %v668 = vpop.f32.mrb[0].mxu0
        %669 = vmatprep.mubr.bf16.mxu0 0
        %670 = vmatmul.mubr.bf16.gmra.mrb[0].mxu0 %v520
        %v671 = vpop.f32.mrb[0].mxu0
        %v672 = vadd.f32 %v347, %v671
        %v673 = vpop.f32.mrb[0].mxu0
        %v674 = vpop.f32.mrb[0].mxu0
        %v675 = vadd.f32 %v347, %v674
        %v676 = vpop.f32.mrb[0].mxu0
        %677 = vmatprep.mubr.bf16.mxu0 0
        %678 = vmatmul.mubr.bf16.gmra.mrb[0].mxu0 %v523
        %v679 = vpop.f32.mrb[0].mxu0
        %v680 = vadd.f32 %v347, %v679
        %v681 = vpop.f32.mrb[0].mxu0
        %v682 = vpop.f32.mrb[0].mxu0
        %v683 = vadd.f32 %v347, %v682
        %v684 = vpop.f32.mrb[0].mxu0
        %685 = vmatprep.mubr.bf16.mxu0 0
        %686 = vmatmul.mubr.bf16.gmra.mrb[0].mxu0 %v526
        %v687 = vpop.f32.mrb[0].mxu0
        %v688 = vadd.f32 %v347, %v687
        %v689 = vpop.f32.mrb[0].mxu0
        %v690 = vpop.f32.mrb[0].mxu0
        %v691 = vadd.f32 %v347, %v690
        %v692 = vpop.f32.mrb[0].mxu0
        %693 = vmatprep.mubr.bf16.mxu0 0
        %694 = vmatmul.mubr.bf16.gmra.mrb[0].mxu0 %v529
        %v695 = vpop.f32.mrb[0].mxu0
        %v696 = vadd.f32 %v347, %v695
        %v697 = vpop.f32.mrb[0].mxu0
        %v698 = vpop.f32.mrb[0].mxu0
        %v699 = vadd.f32 %v347, %v698
        %v700 = vpop.f32.mrb[0].mxu0
        %701 = vmatprep.mubr.bf16.mxu0 0
        %702 = vmatmul.mubr.bf16.gmra.mrb[0].mxu0 %v532
        %v703 = vpop.f32.mrb[0].mxu0
        %v704 = vadd.f32 %v347, %v703
        %v705 = vpop.f32.mrb[0].mxu0
        %v706 = vpop.f32.mrb[0].mxu0
        %v707 = vadd.f32 %v347, %v706
        %v708 = vpop.f32.mrb[0].mxu0
        %709 = vmatprep.mubr.bf16.mxu0 0
        %710 = vmatmul.mubr.bf16.gmra.mrb[0].mxu0 %v535
        %v711 = vpop.f32.mrb[0].mxu0
        %v712 = vadd.f32 %v347, %v711
        %v713 = vpop.f32.mrb[0].mxu0
        %v714 = vpop.f32.mrb[0].mxu0
        %v715 = vadd.f32 %v347, %v714
        %v716 = vpop.f32.mrb[0].mxu0
        %717 = vmatprep.mubr.bf16.mxu0 0
        %718 = vmatmul.mubr.bf16.gmra.mrb[0].mxu0 %v538
        %v719 = vpop.f32.mrb[0].mxu0
        %v720 = vadd.f32 %v347, %v719
        %v721 = vpop.f32.mrb[0].mxu0
        %v722 = vpop.f32.mrb[0].mxu0
        %v723 = vadd.f32 %v347, %v722
        %v724 = vpop.f32.mrb[0].mxu0
        %725 = vmatprep.mubr.bf16.mxu0 0
        %726 = vmatmul.mubr.bf16.gmra.mrb[0].mxu0 %v541
        %v727 = vpop.f32.mrb[0].mxu0
        %v728 = vadd.f32 %v347, %v727
        %v729 = vpop.f32.mrb[0].mxu0
        %v730 = vpop.f32.mrb[0].mxu0
        %v731 = vadd.f32 %v347, %v730
        %v732 = vpop.f32.mrb[0].mxu0
        %733 = vmatprep.mubr.bf16.mxu0 0
        %734 = vmatmul.mubr.bf16.gmra.mrb[0].mxu0 %v544
        %v735 = vpop.f32.mrb[0].mxu0
        %v736 = vadd.f32 %v347, %v735
        %v737 = vpop.f32.mrb[0].mxu0
        %v738 = vpop.f32.mrb[0].mxu0
        %v739 = vadd.f32 %v347, %v738
        %v740 = vpop.f32.mrb[0].mxu0
        %741 = vmatprep.mubr.bf16.mxu0 0
        %742 = vmatmul.mubr.bf16.gmra.mrb[0].mxu0 %v547
        %v743 = vpop.f32.mrb[0].mxu0
        %v744 = vadd.f32 %v347, %v743
        %v745 = vpop.f32.mrb[0].mxu0
        %v746 = vpop.f32.mrb[0].mxu0
        %v747 = vadd.f32 %v347, %v746
        %v748 = vpop.f32.mrb[0].mxu0
        %749 = vmatprep.mubr.bf16.mxu0 0
        %750 = vmatmul.mubr.bf16.gmra.mrb[0].mxu0 %v550
        %v751 = vpop.f32.mrb[0].mxu0
        %v752 = vadd.f32 %v347, %v751
        %v753 = vpop.f32.mrb[0].mxu0
        %v754 = vpop.f32.mrb[0].mxu0
        %v755 = vadd.f32 %v347, %v754
        %v756 = vpop.f32.mrb[0].mxu0
        %757 = vmatprep.mubr.bf16.mxu0 0
        %758 = vmatmul.mubr.bf16.gmra.mrb[0].mxu0 %v553
        %v759 = vpop.f32.mrb[0].mxu0
        %v760 = vadd.f32 %v347, %v759
        %v761 = vpop.f32.mrb[0].mxu0
        %v762 = vpop.f32.mrb[0].mxu0
        %v763 = vadd.f32 %v347, %v762
        %v764 = vpop.f32.mrb[0].mxu0
        %765 = vmatprep.mubr.bf16.mxu0 0
        %766 = vmatmul.mubr.bf16.gmra.mrb[0].mxu0 %v556
        %v767 = vpop.f32.mrb[0].mxu0
        %v768 = vadd.f32 %v347, %v767
        %v769 = vpop.f32.mrb[0].mxu0
        %v770 = vpop.f32.mrb[0].mxu0
        %v771 = vadd.f32 %v347, %v770
        %v772 = vpop.f32.mrb[0].mxu0
        %773 = vmatprep.mubr.bf16.mxu0 0
        %774 = vmatmul.mubr.bf16.gmra.mrb[0].mxu0 %v559
        %v775 = vpop.f32.mrb[0].mxu0
        %v776 = vadd.f32 %v347, %v775
        %v777 = vpop.f32.mrb[0].mxu0
        %v778 = vpop.f32.mrb[0].mxu0
        %v779 = vadd.f32 %v347, %v778
        %v780 = vpop.f32.mrb[0].mxu0
        %781 = vmatprep.mubr.bf16.mxu0 0
        %782 = vmatmul.mubr.bf16.gmra.mrb[0].mxu0 %v562
        %v783 = vpop.f32.mrb[0].mxu0
        %v784 = vadd.f32 %v347, %v783
        %v785 = vpop.f32.mrb[0].mxu0
        %v786 = vpop.f32.mrb[0].mxu0
        %v787 = vadd.f32 %v347, %v786
        %v788 = vpop.f32.mrb[0].mxu0
        %789 = vmatprep.mubr.bf16.mxu0 0
        %790 = vmatmul.mubr.bf16.gmra.mrb[0].mxu0 %v565
        %v791 = vpop.f32.mrb[0].mxu0
        %v792 = vadd.f32 %v347, %v791
        %v793 = vpop.f32.mrb[0].mxu0
        %v794 = vpop.f32.mrb[0].mxu0
        %v795 = vadd.f32 %v347, %v794
        %v796 = vpop.f32.mrb[0].mxu0
        %797 = vmatprep.mubr.bf16.mxu0 0
        %798 = vmatmul.mubr.bf16.gmra.mrb[0].mxu0 %v568
        %v799 = vpop.f32.mrb[0].mxu0
        %v800 = vadd.f32 %v347, %v799
        %v801 = vpop.f32.mrb[0].mxu0
        %v802 = vpop.f32.mrb[0].mxu0
        %v803 = vadd.f32 %v347, %v802
        %v804 = vpop.f32.mrb[0].mxu0
        %805 = vmatprep.mubr.bf16.mxu0 0
        %806 = vmatmul.mubr.bf16.gmra.mrb[0].mxu0 %v571
        %v807 = vpop.f32.mrb[0].mxu0
        %v808 = vadd.f32 %v347, %v807
        %v809 = vpop.f32.mrb[0].mxu0
        %v810 = vpop.f32.mrb[0].mxu0
        %v811 = vadd.f32 %v347, %v810
        %v812 = vpop.f32.mrb[0].mxu0
        %813 = vmatprep.mubr.bf16.mxu0 0
        %814 = vmatmul.mubr.bf16.gmra.mrb[0].mxu0 %v574
        %v815 = vpop.f32.mrb[0].mxu0
        %v816 = vadd.f32 %v347, %v815
        %v817 = vpop.f32.mrb[0].mxu0
        %v818 = vpop.f32.mrb[0].mxu0
        %v819 = vadd.f32 %v347, %v818
        %v820 = vpop.f32.mrb[0].mxu0
        %821 = vmatprep.mubr.bf16.mxu0 0
        %822 = vmatmul.mubr.bf16.gmra.mrb[0].mxu0 %v577
        %v823 = vpop.f32.mrb[0].mxu0
        %v824 = vadd.f32 %v347, %v823
        %v825 = vpop.f32.mrb[0].mxu0
        %v826 = vpop.f32.mrb[0].mxu0
        %v827 = vadd.f32 %v347, %v826
        %v828 = vpop.f32.mrb[0].mxu0
        %829 = vmatprep.mubr.bf16.mxu0 0
        %830 = vmatmul.mubr.bf16.gmra.mrb[0].mxu0 %v580
        %v831 = vpop.f32.mrb[0].mxu0
        %v832 = vadd.f32 %v347, %v831
        %v833 = vpop.f32.mrb[0].mxu0
        %v834 = vpop.f32.mrb[0].mxu0
        %v835 = vadd.f32 %v347, %v834
        %v836 = vpop.f32.mrb[0].mxu0
        %837 = vmatprep.mubr.bf16.mxu0 0
        %838 = vmatmul.mubr.bf16.gmra.mrb[0].mxu0 %v583
        %v839 = vpop.f32.mrb[0].mxu0
        %v840 = vadd.f32 %v347, %v839
        %v841 = vpop.f32.mrb[0].mxu0
        %v842 = vpop.f32.mrb[0].mxu0
        %v843 = vadd.f32 %v347, %v842
        %v844 = vpop.f32.mrb[0].mxu0
        %845 = vmatprep.mubr.bf16.mxu0 0
        %846 = vmatmul.mubr.bf16.gmra.mrb[0].mxu0 %v586
        %v847 = vpop.f32.mrb[0].mxu0
        %v848 = vadd.f32 %v347, %v847
        %v849 = vpop.f32.mrb[0].mxu0
        %v850 = vpop.f32.mrb[0].mxu0
        %v851 = vadd.f32 %v347, %v850
        %v852 = vpop.f32.mrb[0].mxu0
        %853 = vmatprep.mubr.bf16.mxu0 0
        %854 = vmatmul.mubr.bf16.gmra.mrb[0].mxu0 %v589
        %v855 = vpop.f32.mrb[0].mxu0
        %v856 = vadd.f32 %v347, %v855
        %v857 = vpop.f32.mrb[0].mxu0
        %v858 = vpop.f32.mrb[0].mxu0
        %v859 = vadd.f32 %v347, %v858
        %v860 = vpop.f32.mrb[0].mxu0
        %861 = vmatprep.mubr.bf16.mxu0 0
        %862 = vmatmul.mubr.bf16.gmra.mrb[0].mxu0 %v592
        %v863 = vpop.f32.mrb[0].mxu0
        %v864 = vadd.f32 %v347, %v863
        %v865 = vpop.f32.mrb[0].mxu0
        %v866 = vpop.f32.mrb[0].mxu0
        %v867 = vadd.f32 %v347, %v866
        %v868 = vpop.f32.mrb[0].mxu0
        %869 = vmatprep.mubr.bf16.mxu0 0
        %870 = vmatmul.mubr.bf16.gmra.mrb[0].mxu0 %v595
        %v871 = vpop.f32.mrb[0].mxu0
        %v872 = vadd.f32 %v347, %v871
        %v873 = vpop.f32.mrb[0].mxu0
        %v874 = vpop.f32.mrb[0].mxu0
        %v875 = vadd.f32 %v347, %v874
        %v876 = vpop.f32.mrb[0].mxu0
        %877 = vmatprep.mubr.bf16.mxu0 0
        %878 = vmatmul.mubr.bf16.gmra.mrb[0].mxu0 %v598
        %v879 = vpop.f32.mrb[0].mxu0
        %v880 = vadd.f32 %v347, %v879
        %v881 = vpop.f32.mrb[0].mxu0
        %v882 = vpop.f32.mrb[0].mxu0
        %v883 = vadd.f32 %v347, %v882
        %v884 = vpop.f32.mrb[0].mxu0
        %885 = vmatprep.mubr.bf16.mxu0 0
        %886 = vmatmul.mubr.bf16.gmra.mrb[0].mxu0 %v601
        %v887 = vpop.f32.mrb[0].mxu0
        %v888 = vadd.f32 %v347, %v887
        %v889 = vpop.f32.mrb[0].mxu0
        %v890 = vpop.f32.mrb[0].mxu0
        %v891 = vadd.f32 %v347, %v890
        %v892 = vpop.f32.mrb[0].mxu0
        %893 = vmatprep.mubr.bf16.mxu0 0
        %894 = vmatmul.mubr.bf16.gmra.mrb[0].mxu0 %v604
        %v895 = vpop.f32.mrb[0].mxu0
        %v896 = vadd.f32 %v347, %v895
        %v897 = vpop.f32.mrb[0].mxu0
        %v898 = vpop.f32.mrb[0].mxu0
        %v899 = vadd.f32 %v347, %v898
        %v900 = vpop.f32.mrb[0].mxu0
        %901 = vdwg.mxu0
        %vm902 = vcmask 31744
        %903 = vst.msk [vmem:[%s261] sm:$0xff] %vm902, %v648
        %904 = vst.msk [vmem:[%s261 + $0x8] sm:$0xff] %vm902, %v651
        %905 = vst.msk [vmem:[%s261 + $0x10] sm:$0xff] %vm902, %v656
        %906 = vst.msk [vmem:[%s261 + $0x18] sm:$0xff] %vm902, %v659
        %907 = vst.msk [vmem:[%s261 + $0x20] sm:$0xff] %vm902, %v664
        %908 = vst.msk [vmem:[%s261 + $0x28] sm:$0xff] %vm902, %v667
        %909 = vst.msk [vmem:[%s261 + $0x30] sm:$0xff] %vm902, %v672
        %910 = vst.msk [vmem:[%s261 + $0x38] sm:$0xff] %vm902, %v675
        %911 = vst.msk [vmem:[%s261 + $0x40] sm:$0xff] %vm902, %v680
        %912 = vst.msk [vmem:[%s261 + $0x48] sm:$0xff] %vm902, %v683
        %913 = vst.msk [vmem:[%s261 + $0x50] sm:$0xff] %vm902, %v688
        %914 = vst.msk [vmem:[%s261 + $0x58] sm:$0xff] %vm902, %v691
        %915 = vst.msk [vmem:[%s261 + $0x60] sm:$0xff] %vm902, %v696
        %916 = vst.msk [vmem:[%s261 + $0x68] sm:$0xff] %vm902, %v699
        %917 = vst.msk [vmem:[%s261 + $0x70] sm:$0xff] %vm902, %v704
        %918 = vst.msk [vmem:[%s261 + $0x78] sm:$0xff] %vm902, %v707
        %919 = vst.msk [vmem:[%s261 + $0x80] sm:$0xff] %vm902, %v712
        %920 = vst.msk [vmem:[%s261 + $0x88] sm:$0xff] %vm902, %v715
        %921 = vst.msk [vmem:[%s261 + $0x90] sm:$0xff] %vm902, %v720
        %922 = vst.msk [vmem:[%s261 + $0x98] sm:$0xff] %vm902, %v723
        %923 = vst.msk [vmem:[%s261 + $0xa0] sm:$0xff] %vm902, %v728
        %924 = vst.msk [vmem:[%s261 + $0xa8] sm:$0xff] %vm902, %v731
        %925 = vst.msk [vmem:[%s261 + $0xb0] sm:$0xff] %vm902, %v736
        %926 = vst.msk [vmem:[%s261 + $0xb8] sm:$0xff] %vm902, %v739
        %927 = vst.msk [vmem:[%s261 + $0xc0] sm:$0xff] %vm902, %v744
        %928 = vst.msk [vmem:[%s261 + $0xc8] sm:$0xff] %vm902, %v747
        %929 = vst.msk [vmem:[%s261 + $0xd0] sm:$0xff] %vm902, %v752
        %930 = vst.msk [vmem:[%s261 + $0xd8] sm:$0xff] %vm902, %v755
        %931 = vst.msk [vmem:[%s261 + $0xe0] sm:$0xff] %vm902, %v760
        %932 = vst.msk [vmem:[%s261 + $0xe8] sm:$0xff] %vm902, %v763
        %933 = vst.msk [vmem:[%s261 + $0xf0] sm:$0xff] %vm902, %v768
        %934 = vst.msk [vmem:[%s261 + $0xf8] sm:$0xff] %vm902, %v771
        %935 = vst.msk [vmem:[%s261 + $0x100] sm:$0xff] %vm902, %v776
        %936 = vst.msk [vmem:[%s261 + $0x108] sm:$0xff] %vm902, %v779
        %937 = vst.msk [vmem:[%s261 + $0x110] sm:$0xff] %vm902, %v784
        %938 = vst.msk [vmem:[%s261 + $0x118] sm:$0xff] %vm902, %v787
        %939 = vst.msk [vmem:[%s261 + $0x120] sm:$0xff] %vm902, %v792
        %940 = vst.msk [vmem:[%s261 + $0x128] sm:$0xff] %vm902, %v795
        %941 = vst.msk [vmem:[%s261 + $0x130] sm:$0xff] %vm902, %v800
        %942 = vst.msk [vmem:[%s261 + $0x138] sm:$0xff] %vm902, %v803
        %943 = vst.msk [vmem:[%s261 + $0x140] sm:$0xff] %vm902, %v808
        %944 = vst.msk [vmem:[%s261 + $0x148] sm:$0xff] %vm902, %v811
        %945 = vst.msk [vmem:[%s261 + $0x150] sm:$0xff] %vm902, %v816
        %946 = vst.msk [vmem:[%s261 + $0x158] sm:$0xff] %vm902, %v819
        %947 = vst.msk [vmem:[%s261 + $0x160] sm:$0xff] %vm902, %v824
        %948 = vst.msk [vmem:[%s261 + $0x168] sm:$0xff] %vm902, %v827
        %949 = vst.msk [vmem:[%s261 + $0x170] sm:$0xff] %vm902, %v832
        %950 = vst.msk [vmem:[%s261 + $0x178] sm:$0xff] %vm902, %v835
        %951 = vst.msk [vmem:[%s261 + $0x180] sm:$0xff] %vm902, %v840
        %952 = vst.msk [vmem:[%s261 + $0x188] sm:$0xff] %vm902, %v843
        %953 = vst.msk [vmem:[%s261 + $0x190] sm:$0xff] %vm902, %v848
        %954 = vst.msk [vmem:[%s261 + $0x198] sm:$0xff] %vm902, %v851
        %955 = vst.msk [vmem:[%s261 + $0x1a0] sm:$0xff] %vm902, %v856
        %956 = vst.msk [vmem:[%s261 + $0x1a8] sm:$0xff] %vm902, %v859
        %957 = vst.msk [vmem:[%s261 + $0x1b0] sm:$0xff] %vm902, %v864
        %958 = vst.msk [vmem:[%s261 + $0x1b8] sm:$0xff] %vm902, %v867
        %959 = vst.msk [vmem:[%s261 + $0x1c0] sm:$0xff] %vm902, %v872
        %960 = vst.msk [vmem:[%s261 + $0x1c8] sm:$0xff] %vm902, %v875
        %961 = vst.msk [vmem:[%s261 + $0x1d0] sm:$0xff] %vm902, %v880
        %962 = vst.msk [vmem:[%s261 + $0x1d8] sm:$0xff] %vm902, %v883
        %963 = vst.msk [vmem:[%s261 + $0x1e0] sm:$0xff] %vm902, %v888
        %964 = vst.msk [vmem:[%s261 + $0x1e8] sm:$0xff] %vm902, %v891
        %965 = vst.msk [vmem:[%s261 + $0x1f0] sm:$0xff] %vm902, %v896
        %966 = vst.msk [vmem:[%s261 + $0x1f8] sm:$0xff] %vm902, %v899
        %v967 = vsel %vm902, %v648, 0.0
        %v968 = vsel %vm902, %v651, 0.0
        %v969 = vadd.f32 %v967, %v968
        %v970 = vsel %vm902, %v656, 0.0
        %v971 = vadd.f32 %v969, %v970
        %v972 = vsel %vm902, %v659, 0.0
        %v973 = vadd.f32 %v971, %v972
        %v974 = vsel %vm902, %v664, 0.0
        %v975 = vadd.f32 %v973, %v974
        %v976 = vsel %vm902, %v667, 0.0
        %v977 = vadd.f32 %v975, %v976
        %v978 = vsel %vm902, %v672, 0.0
        %v979 = vadd.f32 %v977, %v978
        %v980 = vsel %vm902, %v675, 0.0
        %v981 = vadd.f32 %v979, %v980
        %v982 = vsel %vm902, %v680, 0.0
        %v983 = vadd.f32 %v981, %v982
        %v984 = vsel %vm902, %v683, 0.0
        %v985 = vadd.f32 %v983, %v984
        %v986 = vsel %vm902, %v688, 0.0
        %v987 = vadd.f32 %v985, %v986
        %v988 = vsel %vm902, %v691, 0.0
        %v989 = vadd.f32 %v987, %v988
        %v990 = vsel %vm902, %v696, 0.0
        %v991 = vadd.f32 %v989, %v990
        %v992 = vsel %vm902, %v699, 0.0
        %v993 = vadd.f32 %v991, %v992
        %v994 = vsel %vm902, %v704, 0.0
        %v995 = vadd.f32 %v993, %v994
        %v996 = vsel %vm902, %v707, 0.0
        %v997 = vadd.f32 %v995, %v996
        %v998 = vsel %vm902, %v712, 0.0
        %v999 = vadd.f32 %v997, %v998
        %v1000 = vsel %vm902, %v715, 0.0
        %v1001 = vadd.f32 %v999, %v1000
        %v1002 = vsel %vm902, %v720, 0.0
        %v1003 = vadd.f32 %v1001, %v1002
        %v1004 = vsel %vm902, %v723, 0.0
        %v1005 = vadd.f32 %v1003, %v1004
        %v1006 = vsel %vm902, %v728, 0.0
        %v1007 = vadd.f32 %v1005, %v1006
        %v1008 = vsel %vm902, %v731, 0.0
        %v1009 = vadd.f32 %v1007, %v1008
        %v1010 = vsel %vm902, %v736, 0.0
        %v1011 = vadd.f32 %v1009, %v1010
        %v1012 = vsel %vm902, %v739, 0.0
        %v1013 = vadd.f32 %v1011, %v1012
        %v1014 = vsel %vm902, %v744, 0.0
        %v1015 = vadd.f32 %v1013, %v1014
        %v1016 = vsel %vm902, %v747, 0.0
        %v1017 = vadd.f32 %v1015, %v1016
        %v1018 = vsel %vm902, %v752, 0.0
        %v1019 = vadd.f32 %v1017, %v1018
        %v1020 = vsel %vm902, %v755, 0.0
        %v1021 = vadd.f32 %v1019, %v1020
        %v1022 = vsel %vm902, %v760, 0.0
        %v1023 = vadd.f32 %v1021, %v1022
        %v1024 = vsel %vm902, %v763, 0.0
        %v1025 = vadd.f32 %v1023, %v1024
        %v1026 = vsel %vm902, %v768, 0.0
        %v1027 = vadd.f32 %v1025, %v1026
        %v1028 = vsel %vm902, %v771, 0.0
        %v1029 = vadd.f32 %v1027, %v1028
        %v1030 = vsel %vm902, %v776, 0.0
        %v1031 = vadd.f32 %v1029, %v1030
        %v1032 = vsel %vm902, %v779, 0.0
        %v1033 = vadd.f32 %v1031, %v1032
        %v1034 = vsel %vm902, %v784, 0.0
        %v1035 = vadd.f32 %v1033, %v1034
        %v1036 = vsel %vm902, %v787, 0.0
        %v1037 = vadd.f32 %v1035, %v1036
        %v1038 = vsel %vm902, %v792, 0.0
        %v1039 = vadd.f32 %v1037, %v1038
        %v1040 = vsel %vm902, %v795, 0.0
        %v1041 = vadd.f32 %v1039, %v1040
        %v1042 = vsel %vm902, %v800, 0.0
        %v1043 = vadd.f32 %v1041, %v1042
        %v1044 = vsel %vm902, %v803, 0.0
        %v1045 = vadd.f32 %v1043, %v1044
        %v1046 = vsel %vm902, %v808, 0.0
        %v1047 = vadd.f32 %v1045, %v1046
        %v1048 = vsel %vm902, %v811, 0.0
        %v1049 = vadd.f32 %v1047, %v1048
        %v1050 = vsel %vm902, %v816, 0.0
        %v1051 = vadd.f32 %v1049, %v1050
        %v1052 = vsel %vm902, %v819, 0.0
        %v1053 = vadd.f32 %v1051, %v1052
        %v1054 = vsel %vm902, %v824, 0.0
        %v1055 = vadd.f32 %v1053, %v1054
        %v1056 = vsel %vm902, %v827, 0.0
        %v1057 = vadd.f32 %v1055, %v1056
        %v1058 = vsel %vm902, %v832, 0.0
        %v1059 = vadd.f32 %v1057, %v1058
        %v1060 = vsel %vm902, %v835, 0.0
        %v1061 = vadd.f32 %v1059, %v1060
        %v1062 = vsel %vm902, %v840, 0.0
        %v1063 = vadd.f32 %v1061, %v1062
        %v1064 = vsel %vm902, %v843, 0.0
        %v1065 = vadd.f32 %v1063, %v1064
        %v1066 = vsel %vm902, %v848, 0.0
        %v1067 = vadd.f32 %v1065, %v1066
        %v1068 = vsel %vm902, %v851, 0.0
        %v1069 = vadd.f32 %v1067, %v1068
        %v1070 = vsel %vm902, %v856, 0.0
        %v1071 = vadd.f32 %v1069, %v1070
        %v1072 = vsel %vm902, %v859, 0.0
        %v1073 = vadd.f32 %v1071, %v1072
        %v1074 = vsel %vm902, %v864, 0.0
        %v1075 = vadd.f32 %v1073, %v1074
        %v1076 = vsel %vm902, %v867, 0.0
        %v1077 = vadd.f32 %v1075, %v1076
        %v1078 = vsel %vm902, %v872, 0.0
        %v1079 = vadd.f32 %v1077, %v1078
        %v1080 = vsel %vm902, %v875, 0.0
        %v1081 = vadd.f32 %v1079, %v1080
        %v1082 = vsel %vm902, %v880, 0.0
        %v1083 = vadd.f32 %v1081, %v1082
        %v1084 = vsel %vm902, %v883, 0.0
        %v1085 = vadd.f32 %v1083, %v1084
        %v1086 = vsel %vm902, %v888, 0.0
        %v1087 = vadd.f32 %v1085, %v1086
        %v1088 = vsel %vm902, %v891, 0.0
        %v1089 = vadd.f32 %v1087, %v1088
        %v1090 = vsel %vm902, %v896, 0.0
        %v1091 = vadd.f32 %v1089, %v1090
        %v1092 = vsel %vm902, %v899, 0.0
        %v1093 = vadd.f32 %v1091, %v1092
        %v1094 = vrot.slane %v1093, 4
        %v1095 = vadd.f32 %v1093, %v1094
        %v1096 = vrot.slane %v1095, 2
        %v1097 = vadd.f32 %v1095, %v1096
        %v1098 = vrot.slane %v1097, 1
        %v1099 = vadd.f32 %v1097, %v1098
        %v1100 = vmul.f32 %v648, %v648
        %v1101 = vmul.f32 %v651, %v651
        %v1102 = vmul.f32 %v656, %v656
        %v1103 = vmul.f32 %v659, %v659
        %v1104 = vmul.f32 %v664, %v664
        %v1105 = vmul.f32 %v667, %v667
        %v1106 = vmul.f32 %v672, %v672
        %v1107 = vmul.f32 %v675, %v675
        %v1108 = vmul.f32 %v680, %v680
        %v1109 = vmul.f32 %v683, %v683
        %v1110 = vmul.f32 %v688, %v688
        %v1111 = vmul.f32 %v691, %v691
        %v1112 = vmul.f32 %v696, %v696
        %v1113 = vmul.f32 %v699, %v699
        %v1114 = vmul.f32 %v704, %v704
        %v1115 = vmul.f32 %v707, %v707
        %v1116 = vmul.f32 %v712, %v712
        %v1117 = vmul.f32 %v715, %v715
        %v1118 = vmul.f32 %v720, %v720
        %v1119 = vmul.f32 %v723, %v723
        %v1120 = vmul.f32 %v728, %v728
        %v1121 = vmul.f32 %v731, %v731
        %v1122 = vmul.f32 %v736, %v736
        %v1123 = vmul.f32 %v739, %v739
        %v1124 = vmul.f32 %v744, %v744
        %v1125 = vmul.f32 %v747, %v747
        %v1126 = vmul.f32 %v752, %v752
        %v1127 = vmul.f32 %v755, %v755
        %v1128 = vmul.f32 %v760, %v760
        %v1129 = vmul.f32 %v763, %v763
        %v1130 = vmul.f32 %v768, %v768
        %v1131 = vmul.f32 %v771, %v771
        %v1132 = vmul.f32 %v776, %v776
        %v1133 = vmul.f32 %v779, %v779
        %v1134 = vmul.f32 %v784, %v784
        %v1135 = vmul.f32 %v787, %v787
        %v1136 = vmul.f32 %v792, %v792
        %v1137 = vmul.f32 %v795, %v795
        %v1138 = vmul.f32 %v800, %v800
        %v1139 = vmul.f32 %v803, %v803
        %v1140 = vmul.f32 %v808, %v808
        %v1141 = vmul.f32 %v811, %v811
        %v1142 = vmul.f32 %v816, %v816
        %v1143 = vmul.f32 %v819, %v819
        %v1144 = vmul.f32 %v824, %v824
        %v1145 = vmul.f32 %v827, %v827
        %v1146 = vmul.f32 %v832, %v832
        %v1147 = vmul.f32 %v835, %v835
        %v1148 = vmul.f32 %v840, %v840
        %v1149 = vmul.f32 %v843, %v843
        %v1150 = vmul.f32 %v848, %v848
        %v1151 = vmul.f32 %v851, %v851
        %v1152 = vmul.f32 %v856, %v856
        %v1153 = vmul.f32 %v859, %v859
        %v1154 = vmul.f32 %v864, %v864
        %v1155 = vmul.f32 %v867, %v867
        %v1156 = vmul.f32 %v872, %v872
        %v1157 = vmul.f32 %v875, %v875
        %v1158 = vmul.f32 %v880, %v880
        %v1159 = vmul.f32 %v883, %v883
        %v1160 = vmul.f32 %v888, %v888
        %v1161 = vmul.f32 %v891, %v891
        %v1162 = vmul.f32 %v896, %v896
        %v1163 = vmul.f32 %v899, %v899
        %v1164 = vsel %vm902, %v1100, 0.0
        %v1165 = vsel %vm902, %v1101, 0.0
        %v1166 = vadd.f32 %v1164, %v1165
        %v1167 = vsel %vm902, %v1102, 0.0
        %v1168 = vadd.f32 %v1166, %v1167
        %v1169 = vsel %vm902, %v1103, 0.0
        %v1170 = vadd.f32 %v1168, %v1169
        %v1171 = vsel %vm902, %v1104, 0.0
        %v1172 = vadd.f32 %v1170, %v1171
        %v1173 = vsel %vm902, %v1105, 0.0
        %v1174 = vadd.f32 %v1172, %v1173
        %v1175 = vsel %vm902, %v1106, 0.0
        %v1176 = vadd.f32 %v1174, %v1175
        %v1177 = vsel %vm902, %v1107, 0.0
        %v1178 = vadd.f32 %v1176, %v1177
        %v1179 = vsel %vm902, %v1108, 0.0
        %v1180 = vadd.f32 %v1178, %v1179
        %v1181 = vsel %vm902, %v1109, 0.0
        %v1182 = vadd.f32 %v1180, %v1181
        %v1183 = vsel %vm902, %v1110, 0.0
        %v1184 = vadd.f32 %v1182, %v1183
        %v1185 = vsel %vm902, %v1111, 0.0
        %v1186 = vadd.f32 %v1184, %v1185
        %v1187 = vsel %vm902, %v1112, 0.0
        %v1188 = vadd.f32 %v1186, %v1187
        %v1189 = vsel %vm902, %v1113, 0.0
        %v1190 = vadd.f32 %v1188, %v1189
        %v1191 = vsel %vm902, %v1114, 0.0
        %v1192 = vadd.f32 %v1190, %v1191
        %v1193 = vsel %vm902, %v1115, 0.0
        %v1194 = vadd.f32 %v1192, %v1193
        %v1195 = vsel %vm902, %v1116, 0.0
        %v1196 = vadd.f32 %v1194, %v1195
        %v1197 = vsel %vm902, %v1117, 0.0
        %v1198 = vadd.f32 %v1196, %v1197
        %v1199 = vsel %vm902, %v1118, 0.0
        %v1200 = vadd.f32 %v1198, %v1199
        %v1201 = vsel %vm902, %v1119, 0.0
        %v1202 = vadd.f32 %v1200, %v1201
        %v1203 = vsel %vm902, %v1120, 0.0
        %v1204 = vadd.f32 %v1202, %v1203
        %v1205 = vsel %vm902, %v1121, 0.0
        %v1206 = vadd.f32 %v1204, %v1205
        %v1207 = vsel %vm902, %v1122, 0.0
        %v1208 = vadd.f32 %v1206, %v1207
        %v1209 = vsel %vm902, %v1123, 0.0
        %v1210 = vadd.f32 %v1208, %v1209
        %v1211 = vsel %vm902, %v1124, 0.0
        %v1212 = vadd.f32 %v1210, %v1211
        %v1213 = vsel %vm902, %v1125, 0.0
        %v1214 = vadd.f32 %v1212, %v1213
        %v1215 = vsel %vm902, %v1126, 0.0
        %v1216 = vadd.f32 %v1214, %v1215
        %v1217 = vsel %vm902, %v1127, 0.0
        %v1218 = vadd.f32 %v1216, %v1217
        %v1219 = vsel %vm902, %v1128, 0.0
        %v1220 = vadd.f32 %v1218, %v1219
        %v1221 = vsel %vm902, %v1129, 0.0
        %v1222 = vadd.f32 %v1220, %v1221
        %v1223 = vsel %vm902, %v1130, 0.0
        %v1224 = vadd.f32 %v1222, %v1223
        %v1225 = vsel %vm902, %v1131, 0.0
        %v1226 = vadd.f32 %v1224, %v1225
        %v1227 = vsel %vm902, %v1132, 0.0
        %v1228 = vadd.f32 %v1226, %v1227
        %v1229 = vsel %vm902, %v1133, 0.0
        %v1230 = vadd.f32 %v1228, %v1229
        %v1231 = vsel %vm902, %v1134, 0.0
        %v1232 = vadd.f32 %v1230, %v1231
        %v1233 = vsel %vm902, %v1135, 0.0
        %v1234 = vadd.f32 %v1232, %v1233
        %v1235 = vsel %vm902, %v1136, 0.0
        %v1236 = vadd.f32 %v1234, %v1235
        %v1237 = vsel %vm902, %v1137, 0.0
        %v1238 = vadd.f32 %v1236, %v1237
        %v1239 = vsel %vm902, %v1138, 0.0
        %v1240 = vadd.f32 %v1238, %v1239
        %v1241 = vsel %vm902, %v1139, 0.0
        %v1242 = vadd.f32 %v1240, %v1241
        %v1243 = vsel %vm902, %v1140, 0.0
        %v1244 = vadd.f32 %v1242, %v1243
        %v1245 = vsel %vm902, %v1141, 0.0
        %v1246 = vadd.f32 %v1244, %v1245
        %v1247 = vsel %vm902, %v1142, 0.0
        %v1248 = vadd.f32 %v1246, %v1247
        %v1249 = vsel %vm902, %v1143, 0.0
        %v1250 = vadd.f32 %v1248, %v1249
        %v1251 = vsel %vm902, %v1144, 0.0
        %v1252 = vadd.f32 %v1250, %v1251
        %v1253 = vsel %vm902, %v1145, 0.0
        %v1254 = vadd.f32 %v1252, %v1253
        %v1255 = vsel %vm902, %v1146, 0.0
        %v1256 = vadd.f32 %v1254, %v1255
        %v1257 = vsel %vm902, %v1147, 0.0
        %v1258 = vadd.f32 %v1256, %v1257
        %v1259 = vsel %vm902, %v1148, 0.0
        %v1260 = vadd.f32 %v1258, %v1259
        %v1261 = vsel %vm902, %v1149, 0.0
        %v1262 = vadd.f32 %v1260, %v1261
        %v1263 = vsel %vm902, %v1150, 0.0
        %v1264 = vadd.f32 %v1262, %v1263
        %v1265 = vsel %vm902, %v1151, 0.0
        %v1266 = vadd.f32 %v1264, %v1265
        %v1267 = vsel %vm902, %v1152, 0.0
        %v1268 = vadd.f32 %v1266, %v1267
        %v1269 = vsel %vm902, %v1153, 0.0
        %v1270 = vadd.f32 %v1268, %v1269
        %v1271 = vsel %vm902, %v1154, 0.0
        %v1272 = vadd.f32 %v1270, %v1271
        %v1273 = vsel %vm902, %v1155, 0.0
        %v1274 = vadd.f32 %v1272, %v1273
        %v1275 = vsel %vm902, %v1156, 0.0
        %v1276 = vadd.f32 %v1274, %v1275
        %v1277 = vsel %vm902, %v1157, 0.0
        %v1278 = vadd.f32 %v1276, %v1277
        %v1279 = vsel %vm902, %v1158, 0.0
        %v1280 = vadd.f32 %v1278, %v1279
        %v1281 = vsel %vm902, %v1159, 0.0
        %v1282 = vadd.f32 %v1280, %v1281
        %v1283 = vsel %vm902, %v1160, 0.0
        %v1284 = vadd.f32 %v1282, %v1283
        %v1285 = vsel %vm902, %v1161, 0.0
        %v1286 = vadd.f32 %v1284, %v1285
        %v1287 = vsel %vm902, %v1162, 0.0
        %v1288 = vadd.f32 %v1286, %v1287
        %v1289 = vsel %vm902, %v1163, 0.0
        %v1290 = vadd.f32 %v1288, %v1289
        %v1291 = vrot.slane %v1290, 4
        %v1292 = vadd.f32 %v1290, %v1291
        %v1293 = vrot.slane %v1292, 2
        %v1294 = vadd.f32 %v1292, %v1293
        %v1295 = vrot.slane %v1294, 1
        %v1296 = vadd.f32 %v1294, %v1295
        %vm1297 = vcmask 1040384
        %v1298 = vsel %vm1297, %v1099, %v1296
        %vm1299 = vcmask 25600
        %1300 = vst.msk [vmem:[%s270] sm:$0x3] %vm1299, %v1298
        %s1301 = smul.u32 64, %s22
        %p1302 = scmp.lt.s32.totalorder %s21, 0
        %s1303 = scalar_select %p1302, %s21, 0
        %p1304 = scmp.lt.s32.totalorder %s1301, 511
        %s1305 = scalar_select %p1304, %s1301, 511
        %s1306 = smul.addr %s1303, 512
        %s1307 = sadd.s32 %s1305, %s1306
        %s1308 = smul.addr %s1307, 8
        %s1309 = scalar_lea.vmem %s3, %s1308
        %p1310 = scmp.lt.s32.totalorder %s21, 0
        %s1311 = scalar_select %p1310, %s21, 0
        %p1312 = scmp.lt.s32.totalorder %s22, 7
        %s1313 = scalar_select %p1312, %s22, 7
        %s1314 = smul.addr %s1311, 8
        %s1315 = sadd.s32 %s1313, %s1314
        %s1316 = smul.addr %s1315, 2
        %s1317 = scalar_lea.vmem %s4, %s1316
        // Predicated region
        $region37: #{conv_norm_gemm.1} parent=31 // pred_check
          %p1318 = pneg %p119
        $region38: #{conv_norm_gemm.1} parent=31 // pred_check_branch
          %1320 = sbr.rel (%p1318) target = $region40
        $region39: #{conv_norm_gemm.1} parent=31 // pred_region
          %s1321 = smul.u32 64, %s22
        $region40: #{conv_norm_gemm.1} parent=31 // pred_fallthru
          _
        // Predicated region
        $region41: #{conv_norm_gemm.1} parent=31 // pred_check
          %p1322 = pneg %p147
        $region42: #{conv_norm_gemm.1} parent=31 // pred_check_branch
          %1324 = sbr.rel (%p1322) target = $region44
        $region43: #{conv_norm_gemm.1} parent=31 // pred_region
          _
        $region44: #{conv_norm_gemm.1} parent=31 // pred_fallthru
          _
      $region32: #{conv_norm_gemm.1} parent=5 // pred_fallthru
        _
      %p1325 = scmp.le.s32.totalorder 2, %s12
      // Predicated region
      $region45: #{conv_norm_gemm.1} parent=5 // pred_check
        %p1326 = pneg %p1325
      $region46: #{conv_norm_gemm.1} parent=5 // pred_check_branch
        %1328 = sbr.rel (%p1326) target = $region48
      $region47: #{conv_norm_gemm.1} parent=5 // pred_region
        %s1329 = ssub.s32 %s12, 2
        // Predicated region
        $region49: #{conv_norm_gemm.1} parent=47 // pred_check
          %p1330 = pneg %p125
        $region50: #{conv_norm_gemm.1} parent=47 // pred_check_branch
          %1332 = sbr.rel (%p1330) target = $region52
        $region51: #{conv_norm_gemm.1} parent=47 // pred_region
          %s1333 = smul.u32 64, %s24
          %p1334 = scmp.lt.s32.totalorder %s23, 0
          %s1335 = scalar_select %p1334, %s23, 0
          %p1336 = scmp.lt.s32.totalorder %s1333, 511
          %s1337 = scalar_select %p1336, %s1333, 511
          %s1338 = smul.addr %s1335, 512
          %s1339 = sadd.s32 %s1337, %s1338
          %s1340 = smul.addr %s1339, 8
          %s1341 = scalar_lea.vmem %s3, %s1340
        $region52: #{conv_norm_gemm.1} parent=47 // pred_fallthru
          _
        // Predicated region
        $region53: #{conv_norm_gemm.1} parent=47 // pred_check
          %p1342 = pneg %p153
        $region54: #{conv_norm_gemm.1} parent=47 // pred_check_branch
          %1344 = sbr.rel (%p1342) target = $region56
        $region55: #{conv_norm_gemm.1} parent=47 // pred_region
          %p1345 = scmp.lt.s32.totalorder %s23, 0
          %s1346 = scalar_select %p1345, %s23, 0
          %p1347 = scmp.lt.s32.totalorder %s24, 7
          %s1348 = scalar_select %p1347, %s24, 7
          %s1349 = smul.addr %s1346, 8
          %s1350 = sadd.s32 %s1348, %s1349
          %s1351 = smul.addr %s1350, 2
          %s1352 = scalar_lea.vmem %s4, %s1351
        $region56: #{conv_norm_gemm.1} parent=47 // pred_fallthru
          _
      $region48: #{conv_norm_gemm.1} parent=5 // pred_fallthru
        _
    $region6: #{conv_norm_gemm.1} parent=1 // loop_footer
      %s16 = sadd.s32 1, %s12
    $region7: #{conv_norm_gemm.1} parent=1 // loop_footer_branch
      %11 = sbr.rel target = $region3
    $region8: #{conv_norm_gemm.1} parent=1 // loop_exit
      _
    %1353 = vsyncpa [#allocation3], 1
    %s1354 = scalar_lea.sflag [#allocation3], 1
    %1355 = vsyncpa %s1354, 1

</llo_original>
